<compile_context>
chip_gen: v6e
topology: v6e:2x2x1
jax: 0.10.0
libtpu: 0.0.40
codegen_flags: <defaults>
</compile_context>

<pallas_src>
from functools import partial

import jax
import jax.numpy as jnp
from jax.experimental import pallas as pl
from jax.experimental.pallas import tpu as pltpu


def downscale_kernel(grp8, L3, x_ref, w3a_ref, w3b_ref, b3_ref, w4_ref, b4_ref,
                     w5_ref, b5_ref, o_ref, buf_ref):
    # x_ref  : (M, 2C)  pair-packed padded input (compute dtype); per-item
    #                   group stride = grp8 rows, rows j >= L3+1 are zero pads
    # w3a/b  : (2C, C)  conv_3 weights, taps {0,1} / {2,3} folded on K
    # w4/w5  : (3, C, C) per-tap conv_4 / conv_5 weights
    # b3/4/5 : (1, C)   f32 biases
    # o_ref  : (M, C)   output block (rows j in [L3, grp8) of a group = filler)
    # buf_ref: (M+1, C) compute-dtype halo buffer; buf[b] mirrors row b-1
    M, C = o_ref.shape
    N = M - 1                      # rows actually computed (last row is filler)
    cdt = buf_ref.dtype
    f32 = jnp.float32

    # Explicit zero halo rows: row 0 = left halo of the first item, row M =
    # right halo of the last item.  Rewritten every grid step -> safe under
    # any "parallel" scheduling.
    zrow = jnp.zeros((1, C), cdt)
    buf_ref[0:1, :] = zrow
    buf_ref[M:M + 1, :] = zrow

    # Rows that carry real outputs: j = r % grp8 < L3.  The masked spacer rows
    # double as the zero halos sitting between consecutive items.
    ridx = jax.lax.broadcasted_iota(jnp.int32, (N, 1), 0)
    keep = (ridx % grp8) < L3

    b3 = b3_ref[...]
    b4 = b4_ref[...]
    b5 = b5_ref[...]

    # ---- conv_3 (k=4, stride 2, pad 2) + ReLU: two K=2C MXU dots on the same
    # packed block at row offsets 0 and +1 (out[r] = pairs[r]@Wa + pairs[r+1]@Wb).
    ya = jnp.dot(x_ref[0:N, :], w3a_ref[...], preferred_element_type=f32)
    yb = jnp.dot(x_ref[1:M, :], w3b_ref[...], preferred_element_type=f32)
    x3 = jnp.maximum(ya + yb + b3, 0.0)                         # (N, C) f32

    def conv_k3(xc, w_ref, b):
        # k=3, pad=1 conv of the masked compute-dtype rows `xc`; `xc` is also
        # written into buf[1:N+1] so the +-1 taps are shifted buffer loads.
        buf_ref[1:N + 1, :] = xc
        y = jnp.dot(buf_ref[0:N, :], w_ref[0], preferred_element_type=f32)
        y = y + jnp.dot(xc, w_ref[1], preferred_element_type=f32)
        y = y + jnp.dot(buf_ref[2:N + 2, :], w_ref[2], preferred_element_type=f32)
        return y + b

    # ---- conv_4 (k=3, pad 1) + ReLU, residual add (residual chain stays f32)
    x3_c = jnp.where(keep, x3, 0.0).astype(cdt)
    x4 = jnp.maximum(conv_k3(x3_c, w4_ref, b4), 0.0) + x3

    # ---- conv_5 (k=3, pad 1) + ReLU, residual add
    x4_c = jnp.where(keep, x4, 0.0).astype(cdt)
    x5 = jnp.maximum(conv_k3(x4_c, w5_ref, b5), 0.0) + x4

    o_ref[0:N, :] = x5.astype(o_ref.dtype)
    o_ref[N:M, :] = jnp.zeros((M - N, C), o_ref.dtype)   # filler row, sliced off


def downscale_block(x, params, *, block_b=8, compute_dtype=jnp.float32,
                    out_dtype=None, channels_last=False,
                    vmem_budget_bytes=28 * 1024 * 1024):
    """DownscaleBlock forward.

    x: (B, C, L) (PyTorch NCL) or (B, L, C) if channels_last=True.
    params = (w3, b3, w4, b4, w5, b5) in torch Conv1d layout (Cout, Cin, K).
    Returns (B, C, L3) / (B, L3, C) with L3 = L//2 + 1, dtype = out_dtype
    (defaults to compute_dtype).
    """
    w3, b3, w4, b4, w5, b5 = params
    if channels_last:
        B, L, C = x.shape
        x_lc = x                                    # no wrapper transposes
    else:
        B, C, L = x.shape
        x_lc = jnp.transpose(x, (0, 2, 1))          # (B, L, C)

    cdt = jnp.dtype(compute_dtype)
    odt = jnp.dtype(out_dtype) if out_dtype is not None else cdt

    K3, S3, P3 = 4, 2, 2
    L3 = (L + 2 * P3 - K3) // S3 + 1                # conv_3 output length
    grp8 = ((L3 + 1 + 7) // 8) * 8                  # per-item row stride (8-aligned)

    # ---- batch tile: VMEM budget + at least 2 grid steps for v7x's two TCs.
    cdt_b, odt_b = cdt.itemsize, odt.itemsize
    per_row = C * (2 * 2 * cdt_b      # input block rows (., 2C), double buffered
                   + 2 * odt_b        # output block, double buffered
                   + cdt_b            # halo scratch
                   + 6 * 4)           # live f32 intermediates (ya, yb, x3..x5, acc)
    w_bytes = 2 * (2 * 2 * C * C + 2 * 3 * C * C) * cdt_b + 6 * C * 4
    cap = max(1, int((vmem_budget_bytes - w_bytes) // (per_row * grp8)))
    bt = max(1, min(block_b, B, cap))
    if B > 1:
        bt = min(bt, -(-B // 2))                    # grid >= 2 -> both v7x TCs busy
    B_pad = -(-B // bt) * bt
    M = bt * grp8
    vmem_limit = int(max(32 * 1024 * 1024,
                         (per_row * grp8 * bt + w_bytes) * 5 // 4))

    # ---- pack: zero-pad time to 2*grp8 samples per item and fold consecutive
    # sample pairs onto the lane axis -> one flat (B_pad*grp8, 2C) array.
    pad_r = 2 * grp8 - L - P3
    x_pad = jnp.pad(x_lc, ((0, B_pad - B), (P3, pad_r), (0, 0)))
    x_pairs = x_pad.reshape(B_pad * grp8, 2 * C).astype(cdt)

    # Weights as (tap, Cin, Cout); conv_3 taps folded pairwise into (2C, C).
    w3_t = jnp.transpose(w3, (2, 1, 0)).astype(cdt)             # (4, C, C)
    w3a = w3_t[0:2].reshape(2 * C, C)
    w3b = w3_t[2:4].reshape(2 * C, C)
    w4_t = jnp.transpose(w4, (2, 1, 0)).astype(cdt)             # (3, C, C)
    w5_t = jnp.transpose(w5, (2, 1, 0)).astype(cdt)
    b3_r = b3.reshape(1, C).astype(jnp.float32)
    b4_r = b4.reshape(1, C).astype(jnp.float32)
    b5_r = b5.reshape(1, C).astype(jnp.float32)

    out_flat = pl.pallas_call(
        partial(downscale_kernel, grp8, L3),
        out_shape=jax.ShapeDtypeStruct((B_pad * grp8, C), odt),
        grid=(B_pad // bt,),
        in_specs=[
            pl.BlockSpec((M, 2 * C), lambda b: (b, 0)),
            pl.BlockSpec((2 * C, C), lambda b: (0, 0)),
            pl.BlockSpec((2 * C, C), lambda b: (0, 0)),
            pl.BlockSpec((1, C), lambda b: (0, 0)),
            pl.BlockSpec((3, C, C), lambda b: (0, 0, 0)),
            pl.BlockSpec((1, C), lambda b: (0, 0)),
            pl.BlockSpec((3, C, C), lambda b: (0, 0, 0)),
            pl.BlockSpec((1, C), lambda b: (0, 0)),
        ],
        out_specs=pl.BlockSpec((M, C), lambda b: (b, 0)),
        scratch_shapes=[pltpu.VMEM((M + 1, C), cdt)],
        compiler_params=pltpu.CompilerParams(
            dimension_semantics=("parallel",),
            vmem_limit_bytes=vmem_limit),
    )(x_pairs, w3a, w3b, b3_r, w4_t, b4_r, w5_t, b5_r)

    out = out_flat.reshape(B_pad, grp8, C)[:B, :L3, :]
    if channels_last:
        return out
    return jnp.transpose(out, (0, 2, 1))


# ---------------- pure-JAX reference for verification ----------------
def _conv1d_ref(x, w, b, stride, padding):
    out = jax.lax.conv_general_dilated(
        x, w, window_strides=(stride,), padding=[(padding, padding)],
        dimension_numbers=("NCH", "OIH", "NCH"))
    return out + b[None, :, None]


def reference(x, params):
    w3, b3, w4, b4, w5, b5 = params
    x3 = jax.nn.relu(_conv1d_ref(x, w3, b3, 2, 2))
    x4 = jax.nn.relu(_conv1d_ref(x3, w4, b4, 1, 1)) + x3
    x5 = jax.nn.relu(_conv1d_ref(x4, w5, b5, 1, 1)) + x4
    return x5


if __name__ == "__main__":
    B, C, L = 4, 8, 16          # batch, num_hiddens, sequence length
    key = jax.random.PRNGKey(0)
    ks = jax.random.split(key, 7)
    x = jax.random.normal(ks[0], (B, C, L), jnp.float32)
    # deterministic synthetic parameters (torch Conv1d layout: (Cout, Cin, K))
    w3 = 0.1 * jax.random.normal(ks[1], (C, C, 4), jnp.float32)
    b3 = 0.1 * jax.random.normal(ks[2], (C,), jnp.float32)
    w4 = 0.1 * jax.random.normal(ks[3], (C, C, 3), jnp.float32)
    b4 = 0.1 * jax.random.normal(ks[4], (C,), jnp.float32)
    w5 = 0.1 * jax.random.normal(ks[5], (C, C, 3), jnp.float32)
    b5 = 0.1 * jax.random.normal(ks[6], (C,), jnp.float32)
    params = (w3, b3, w4, b4, w5, b5)

    ref = reference(x, params)

    # f32 compute, f32 output (tight check)
    out_f32 = jax.jit(lambda xx, pp: downscale_block(xx, pp))(x, params)
    jax.block_until_ready(out_f32)
    assert out_f32.shape == ref.shape, (out_f32.shape, ref.shape)
    assert jnp.allclose(out_f32, ref, atol=1e-4, rtol=1e-4), \
        float(jnp.max(jnp.abs(out_f32 - ref)))

    # channels-last I/O path (no wrapper transposes)
    out_cl = jax.jit(lambda xx, pp: downscale_block(
        xx, pp, channels_last=True))(jnp.transpose(x, (0, 2, 1)), params)
    jax.block_until_ready(out_cl)
    assert jnp.allclose(jnp.transpose(out_cl, (0, 2, 1)), ref,
                        atol=1e-4, rtol=1e-4)

    # bf16 compute + bf16 output (beneficial on v5e/v6e/v7x) — f32 accumulation,
    # f32 bias/residual chain; looser tolerance.
    out_bf16 = jax.jit(lambda xx, pp: downscale_block(
        xx, pp, compute_dtype=jnp.bfloat16))(x, params)
    jax.block_until_ready(out_bf16)
    assert out_bf16.shape == ref.shape
    assert out_bf16.dtype == jnp.bfloat16
    assert jnp.allclose(out_bf16.astype(jnp.float32), ref, atol=6e-2, rtol=6e-2), \
        float(jnp.max(jnp.abs(out_bf16.astype(jnp.float32) - ref)))

    print("KERNEL_OK")
</pallas_src>

<mosaic_0001>
module attributes {stable_mosaic.version = 11 : i64} {
  func.func @downscale_kernel(%arg0: i32, %arg1: memref<32x16xf32, #tpu.memory_space<vmem>>, %arg2: memref<16x8xf32, #tpu.memory_space<vmem>>, %arg3: memref<16x8xf32, #tpu.memory_space<vmem>>, %arg4: memref<1x8xf32, #tpu.memory_space<vmem>>, %arg5: memref<3x8x8xf32, #tpu.memory_space<vmem>>, %arg6: memref<1x8xf32, #tpu.memory_space<vmem>>, %arg7: memref<3x8x8xf32, #tpu.memory_space<vmem>>, %arg8: memref<1x8xf32, #tpu.memory_space<vmem>>, %arg9: memref<32x8xf32, #tpu.memory_space<vmem>>, %arg10: memref<33x8xf32, #tpu.memory_space<vmem>>) attributes {dimension_semantics = [#tpu.dimension_semantics<parallel>], iteration_bounds = array<i64: 2>, scalar_prefetch = 0 : i64, scratch_operands = 1 : i64, tpu.core_type = #tpu.core_type<tc>, window_params = [{transform_indices = @transform_0, window_bounds = array<i64: 32, 16>}, {pipeline_mode = #tpu.pipeline_mode<synchronous>, transform_indices = @transform_1, window_bounds = array<i64: 16, 8>}, {pipeline_mode = #tpu.pipeline_mode<synchronous>, transform_indices = @transform_2, window_bounds = array<i64: 16, 8>}, {pipeline_mode = #tpu.pipeline_mode<synchronous>, transform_indices = @transform_3, window_bounds = array<i64: 1, 8>}, {pipeline_mode = #tpu.pipeline_mode<synchronous>, transform_indices = @transform_4, window_bounds = array<i64: 3, 8, 8>}, {pipeline_mode = #tpu.pipeline_mode<synchronous>, transform_indices = @transform_5, window_bounds = array<i64: 1, 8>}, {pipeline_mode = #tpu.pipeline_mode<synchronous>, transform_indices = @transform_6, window_bounds = array<i64: 3, 8, 8>}, {pipeline_mode = #tpu.pipeline_mode<synchronous>, transform_indices = @transform_7, window_bounds = array<i64: 1, 8>}, {transform_indices = @transform_8, window_bounds = array<i64: 32, 8>}]} {
    %cst = arith.constant 0.000000e+00 : f32
    %0 = vector.broadcast %cst : f32 to vector<1x8xf32>
    %c0 = arith.constant 0 : index
    %c0_0 = arith.constant 0 : index
    %1 = vector.load %arg10[%c0, %c0_0] : memref<33x8xf32, #tpu.memory_space<vmem>>, vector<1x8xf32>
    tpu.vector_store %arg10[%c0, %c0_0], %0 {strides = array<i32>} : memref<33x8xf32, #tpu.memory_space<vmem>>, vector<1x8xf32>,
    %c32 = arith.constant 32 : index
    %c0_1 = arith.constant 0 : index
    %2 = vector.load %arg10[%c32, %c0_1] : memref<33x8xf32, #tpu.memory_space<vmem>>, vector<1x8xf32>
    tpu.vector_store %arg10[%c32, %c0_1], %0 {strides = array<i32>} : memref<33x8xf32, #tpu.memory_space<vmem>>, vector<1x8xf32>,
    %3 = tpu.iota {dimensions = array<i32: 0>} : vector<31x1xi32>
    %c16_i32 = arith.constant 16 : i32
    %c0_i32 = arith.constant 0 : i32
    %4 = arith.cmpi eq, %c16_i32, %c0_i32 : i32
    %c1_i32 = arith.constant 1 : i32
    %5 = arith.select %4, %c1_i32, %c16_i32 : i32
    %6 = vector.broadcast %5 : i32 to vector<31x1xi32>
    %7 = arith.remsi %3, %6 : vector<31x1xi32>
    %c0_i32_2 = arith.constant 0 : i32
    %8 = vector.broadcast %c0_i32_2 : i32 to vector<31x1xi32>
    %9 = arith.cmpi ne, %7, %8 : vector<31x1xi32>
    %c0_i32_3 = arith.constant 0 : i32
    %10 = vector.broadcast %c0_i32_3 : i32 to vector<31x1xi32>
    %11 = arith.cmpi slt, %7, %10 : vector<31x1xi32>
    %c0_i32_4 = arith.constant 0 : i32
    %12 = arith.cmpi slt, %5, %c0_i32_4 : i32
    %13 = vector.broadcast %12 : i1 to vector<31x1xi1>
    %14 = vector.broadcast %13 : vector<31x1xi1> to vector<31x1xi1>
    %15 = arith.xori %11, %14 : vector<31x1xi1>
    %16 = arith.andi %15, %9 : vector<31x1xi1>
    %17 = vector.broadcast %5 : i32 to vector<31x1xi32>
    %18 = arith.addi %7, %17 : vector<31x1xi32>
    %19 = arith.select %16, %18, %7 : vector<31x1xi1>, vector<31x1xi32>
    %c9_i32 = arith.constant 9 : i32
    %20 = vector.broadcast %c9_i32 : i32 to vector<31x1xi32>
    %21 = arith.cmpi slt, %19, %20 : vector<31x1xi32>
    %c0_5 = arith.constant 0 : index
    %c0_6 = arith.constant 0 : index
    %22 = vector.load %arg4[%c0_5, %c0_6] : memref<1x8xf32, #tpu.memory_space<vmem>>, vector<1x8xf32>
    %c0_7 = arith.constant 0 : index
    %c0_8 = arith.constant 0 : index
    %23 = vector.load %arg6[%c0_7, %c0_8] : memref<1x8xf32, #tpu.memory_space<vmem>>, vector<1x8xf32>
    %c0_9 = arith.constant 0 : index
    %c0_10 = arith.constant 0 : index
    %24 = vector.load %arg8[%c0_9, %c0_10] : memref<1x8xf32, #tpu.memory_space<vmem>>, vector<1x8xf32>
    %c0_11 = arith.constant 0 : index
    %c0_12 = arith.constant 0 : index
    %25 = vector.load %arg1[%c0_11, %c0_12] : memref<32x16xf32, #tpu.memory_space<vmem>>, vector<31x16xf32>
    %c0_13 = arith.constant 0 : index
    %c0_14 = arith.constant 0 : index
    %26 = vector.load %arg2[%c0_13, %c0_14] : memref<16x8xf32, #tpu.memory_space<vmem>>, vector<16x8xf32>
    %cst_15 = arith.constant dense<0.000000e+00> : vector<31x8xf32>
    %27 = tpu.matmul %25, %26, %cst_15 {dimension_numbers = #tpu.dot_dimension_numbers<[1], [0], [0], [1], [0, 0, 1, 1], [], []>} : vector<31x16xf32>, vector<16x8xf32>, vector<31x8xf32> -> vector<31x8xf32>
    %c1 = arith.constant 1 : index
    %c0_16 = arith.constant 0 : index
    %28 = vector.load %arg1[%c1, %c0_16] : memref<32x16xf32, #tpu.memory_space<vmem>>, vector<31x16xf32>
    %c0_17 = arith.constant 0 : index
    %c0_18 = arith.constant 0 : index
    %29 = vector.load %arg3[%c0_17, %c0_18] : memref<16x8xf32, #tpu.memory_space<vmem>>, vector<16x8xf32>
    %cst_19 = arith.constant dense<0.000000e+00> : vector<31x8xf32>
    %30 = tpu.matmul %28, %29, %cst_19 {dimension_numbers = #tpu.dot_dimension_numbers<[1], [0], [0], [1], [0, 0, 1, 1], [], []>} : vector<31x16xf32>, vector<16x8xf32>, vector<31x8xf32> -> vector<31x8xf32>
    %31 = arith.addf %27, %30 : vector<31x8xf32>
    %32 = vector.broadcast %22 : vector<1x8xf32> to vector<31x8xf32>
    %33 = arith.addf %31, %32 : vector<31x8xf32>
    %cst_20 = arith.constant 0.000000e+00 : f32
    %34 = vector.broadcast %cst_20 : f32 to vector<31x8xf32>
    %35 = arith.maximumf %33, %34 : vector<31x8xf32>
    %cst_21 = arith.constant 0.000000e+00 : f32
    %36 = vector.shape_cast %21 : vector<31x1xi1> to vector<31x1xi1>
    %37 = vector.broadcast %36 : vector<31x1xi1> to vector<31x8xi1>
    %38 = vector.broadcast %cst_21 : f32 to vector<31x8xf32>
    %39 = arith.select %37, %35, %38 : vector<31x8xi1>, vector<31x8xf32>
    %c1_22 = arith.constant 1 : index
    %c0_23 = arith.constant 0 : index
    %40 = vector.load %arg10[%c1_22, %c0_23] : memref<33x8xf32, #tpu.memory_space<vmem>>, vector<31x8xf32>
    tpu.vector_store %arg10[%c1_22, %c0_23], %39 {strides = array<i32>} : memref<33x8xf32, #tpu.memory_space<vmem>>, vector<31x8xf32>,
    %c0_24 = arith.constant 0 : index
    %c0_25 = arith.constant 0 : index
    %41 = vector.load %arg10[%c0_24, %c0_25] : memref<33x8xf32, #tpu.memory_space<vmem>>, vector<31x8xf32>
    %c0_26 = arith.constant 0 : index
    %c0_27 = arith.constant 0 : index
    %c0_28 = arith.constant 0 : index
    %42 = vector.load %arg5[%c0_26, %c0_27, %c0_28] : memref<3x8x8xf32, #tpu.memory_space<vmem>>, vector<1x8x8xf32>
    %43 = vector.shape_cast %42 : vector<1x8x8xf32> to vector<8x8xf32>
    %cst_29 = arith.constant dense<0.000000e+00> : vector<31x8xf32>
    %44 = tpu.matmul %41, %43, %cst_29 {dimension_numbers = #tpu.dot_dimension_numbers<[1], [0], [0], [1], [0, 0, 1, 1], [], []>} : vector<31x8xf32>, vector<8x8xf32>, vector<31x8xf32> -> vector<31x8xf32>
    %c1_30 = arith.constant 1 : index
    %c0_31 = arith.constant 0 : index
    %c0_32 = arith.constant 0 : index
    %45 = vector.load %arg5[%c1_30, %c0_31, %c0_32] : memref<3x8x8xf32, #tpu.memory_space<vmem>>, vector<1x8x8xf32>
    %46 = vector.shape_cast %45 : vector<1x8x8xf32> to vector<8x8xf32>
    %cst_33 = arith.constant dense<0.000000e+00> : vector<31x8xf32>
    %47 = tpu.matmul %39, %46, %cst_33 {dimension_numbers = #tpu.dot_dimension_numbers<[1], [0], [0], [1], [0, 0, 1, 1], [], []>} : vector<31x8xf32>, vector<8x8xf32>, vector<31x8xf32> -> vector<31x8xf32>
    %48 = arith.addf %44, %47 : vector<31x8xf32>
    %c2 = arith.constant 2 : index
    %c0_34 = arith.constant 0 : index
    %49 = vector.load %arg10[%c2, %c0_34] : memref<33x8xf32, #tpu.memory_space<vmem>>, vector<31x8xf32>
    %c2_35 = arith.constant 2 : index
    %c0_36 = arith.constant 0 : index
    %c0_37 = arith.constant 0 : index
    %50 = vector.load %arg5[%c2_35, %c0_36, %c0_37] : memref<3x8x8xf32, #tpu.memory_space<vmem>>, vector<1x8x8xf32>
    %51 = vector.shape_cast %50 : vector<1x8x8xf32> to vector<8x8xf32>
    %cst_38 = arith.constant dense<0.000000e+00> : vector<31x8xf32>
    %52 = tpu.matmul %49, %51, %cst_38 {dimension_numbers = #tpu.dot_dimension_numbers<[1], [0], [0], [1], [0, 0, 1, 1], [], []>} : vector<31x8xf32>, vector<8x8xf32>, vector<31x8xf32> -> vector<31x8xf32>
    %53 = arith.addf %48, %52 : vector<31x8xf32>
    %54 = vector.broadcast %23 : vector<1x8xf32> to vector<31x8xf32>
    %55 = arith.addf %53, %54 : vector<31x8xf32>
    %cst_39 = arith.constant 0.000000e+00 : f32
    %56 = vector.broadcast %cst_39 : f32 to vector<31x8xf32>
    %57 = arith.maximumf %55, %56 : vector<31x8xf32>
    %58 = arith.addf %57, %35 : vector<31x8xf32>
    %cst_40 = arith.constant 0.000000e+00 : f32
    %59 = vector.shape_cast %21 : vector<31x1xi1> to vector<31x1xi1>
    %60 = vector.broadcast %59 : vector<31x1xi1> to vector<31x8xi1>
    %61 = vector.broadcast %cst_40 : f32 to vector<31x8xf32>
    %62 = arith.select %60, %58, %61 : vector<31x8xi1>, vector<31x8xf32>
    %c1_41 = arith.constant 1 : index
    %c0_42 = arith.constant 0 : index
    %63 = vector.load %arg10[%c1_41, %c0_42] : memref<33x8xf32, #tpu.memory_space<vmem>>, vector<31x8xf32>
    tpu.vector_store %arg10[%c1_41, %c0_42], %62 {strides = array<i32>} : memref<33x8xf32, #tpu.memory_space<vmem>>, vector<31x8xf32>,
    %c0_43 = arith.constant 0 : index
    %c0_44 = arith.constant 0 : index
    %64 = vector.load %arg10[%c0_43, %c0_44] : memref<33x8xf32, #tpu.memory_space<vmem>>, vector<31x8xf32>
    %c0_45 = arith.constant 0 : index
    %c0_46 = arith.constant 0 : index
    %c0_47 = arith.constant 0 : index
    %65 = vector.load %arg7[%c0_45, %c0_46, %c0_47] : memref<3x8x8xf32, #tpu.memory_space<vmem>>, vector<1x8x8xf32>
    %66 = vector.shape_cast %65 : vector<1x8x8xf32> to vector<8x8xf32>
    %cst_48 = arith.constant dense<0.000000e+00> : vector<31x8xf32>
    %67 = tpu.matmul %64, %66, %cst_48 {dimension_numbers = #tpu.dot_dimension_numbers<[1], [0], [0], [1], [0, 0, 1, 1], [], []>} : vector<31x8xf32>, vector<8x8xf32>, vector<31x8xf32> -> vector<31x8xf32>
    %c1_49 = arith.constant 1 : index
    %c0_50 = arith.constant 0 : index
    %c0_51 = arith.constant 0 : index
    %68 = vector.load %arg7[%c1_49, %c0_50, %c0_51] : memref<3x8x8xf32, #tpu.memory_space<vmem>>, vector<1x8x8xf32>
    %69 = vector.shape_cast %68 : vector<1x8x8xf32> to vector<8x8xf32>
    %cst_52 = arith.constant dense<0.000000e+00> : vector<31x8xf32>
    %70 = tpu.matmul %62, %69, %cst_52 {dimension_numbers = #tpu.dot_dimension_numbers<[1], [0], [0], [1], [0, 0, 1, 1], [], []>} : vector<31x8xf32>, vector<8x8xf32>, vector<31x8xf32> -> vector<31x8xf32>
    %71 = arith.addf %67, %70 : vector<31x8xf32>
    %c2_53 = arith.constant 2 : index
    %c0_54 = arith.constant 0 : index
    %72 = vector.load %arg10[%c2_53, %c0_54] : memref<33x8xf32, #tpu.memory_space<vmem>>, vector<31x8xf32>
    %c2_55 = arith.constant 2 : index
    %c0_56 = arith.constant 0 : index
    %c0_57 = arith.constant 0 : index
    %73 = vector.load %arg7[%c2_55, %c0_56, %c0_57] : memref<3x8x8xf32, #tpu.memory_space<vmem>>, vector<1x8x8xf32>
    %74 = vector.shape_cast %73 : vector<1x8x8xf32> to vector<8x8xf32>
    %cst_58 = arith.constant dense<0.000000e+00> : vector<31x8xf32>
    %75 = tpu.matmul %72, %74, %cst_58 {dimension_numbers = #tpu.dot_dimension_numbers<[1], [0], [0], [1], [0, 0, 1, 1], [], []>} : vector<31x8xf32>, vector<8x8xf32>, vector<31x8xf32> -> vector<31x8xf32>
    %76 = arith.addf %71, %75 : vector<31x8xf32>
    %77 = vector.broadcast %24 : vector<1x8xf32> to vector<31x8xf32>
    %78 = arith.addf %76, %77 : vector<31x8xf32>
    %cst_59 = arith.constant 0.000000e+00 : f32
    %79 = vector.broadcast %cst_59 : f32 to vector<31x8xf32>
    %80 = arith.maximumf %78, %79 : vector<31x8xf32>
    %81 = arith.addf %80, %58 : vector<31x8xf32>
    %c0_60 = arith.constant 0 : index
    %c0_61 = arith.constant 0 : index
    %82 = vector.load %arg9[%c0_60, %c0_61] : memref<32x8xf32, #tpu.memory_space<vmem>>, vector<31x8xf32>
    tpu.vector_store %arg9[%c0_60, %c0_61], %81 {strides = array<i32>} : memref<32x8xf32, #tpu.memory_space<vmem>>, vector<31x8xf32>,
    %cst_62 = arith.constant 0.000000e+00 : f32
    %83 = vector.broadcast %cst_62 : f32 to vector<1x8xf32>
    %c31 = arith.constant 31 : index
    %c0_63 = arith.constant 0 : index
    %84 = vector.load %arg9[%c31, %c0_63] : memref<32x8xf32, #tpu.memory_space<vmem>>, vector<1x8xf32>
    tpu.vector_store %arg9[%c31, %c0_63], %83 {strides = array<i32>} : memref<32x8xf32, #tpu.memory_space<vmem>>, vector<1x8xf32>,
    return
  }
  func.func @transform_0(%arg0: i32) -> (i32, i32) {
    %c0_i32 = arith.constant 0 : i32
    %c0_i32_0 = arith.constant 0 : i32
    return %arg0, %c0_i32 : i32, i32
  }
  func.func @transform_1(%arg0: i32) -> (i32, i32) {
    %c0_i32 = arith.constant 0 : i32
    %c0_i32_0 = arith.constant 0 : i32
    %c0_i32_1 = arith.constant 0 : i32
    return %c0_i32, %c0_i32_0 : i32, i32
  }
  func.func @transform_2(%arg0: i32) -> (i32, i32) {
    %c0_i32 = arith.constant 0 : i32
    %c0_i32_0 = arith.constant 0 : i32
    %c0_i32_1 = arith.constant 0 : i32
    return %c0_i32, %c0_i32_0 : i32, i32
  }
  func.func @transform_3(%arg0: i32) -> (i32, i32) {
    %c0_i32 = arith.constant 0 : i32
    %c0_i32_0 = arith.constant 0 : i32
    %c0_i32_1 = arith.constant 0 : i32
    return %c0_i32, %c0_i32_0 : i32, i32
  }
  func.func @transform_4(%arg0: i32) -> (i32, i32, i32) {
    %c0_i32 = arith.constant 0 : i32
    %c0_i32_0 = arith.constant 0 : i32
    %c0_i32_1 = arith.constant 0 : i32
    %c0_i32_2 = arith.constant 0 : i32
    return %c0_i32, %c0_i32_0, %c0_i32_1 : i32, i32, i32
  }
  func.func @transform_5(%arg0: i32) -> (i32, i32) {
    %c0_i32 = arith.constant 0 : i32
    %c0_i32_0 = arith.constant 0 : i32
    %c0_i32_1 = arith.constant 0 : i32
    return %c0_i32, %c0_i32_0 : i32, i32
  }
  func.func @transform_6(%arg0: i32) -> (i32, i32, i32) {
    %c0_i32 = arith.constant 0 : i32
    %c0_i32_0 = arith.constant 0 : i32
    %c0_i32_1 = arith.constant 0 : i32
    %c0_i32_2 = arith.constant 0 : i32
    return %c0_i32, %c0_i32_0, %c0_i32_1 : i32, i32, i32
  }
  func.func @transform_7(%arg0: i32) -> (i32, i32) {
    %c0_i32 = arith.constant 0 : i32
    %c0_i32_0 = arith.constant 0 : i32
    %c0_i32_1 = arith.constant 0 : i32
    return %c0_i32, %c0_i32_0 : i32, i32
  }
  func.func @transform_8(%arg0: i32) -> (i32, i32) {
    %c0_i32 = arith.constant 0 : i32
    %c0_i32_0 = arith.constant 0 : i32
    return %arg0, %c0_i32 : i32, i32
  }
}

</mosaic_0001>

<llo_original>
// kernel: _lambda_.1
$region0: #{_lambda_.1}
  #allocation0 [shape = 'u32[]', space=smem, size = 0x4, offset = 0x4, fixed_abs, tag = 'smem constant byte address 0x4 - core index']
  #allocation1 [shape = 'u32[144,128]{1,0:T(1,128)}', space=vmem, size = 0x12000, scoped, tag = 'internal scratch']
  #allocation2 [shape = 'f32[33,8]{1,0:T(8,128)}', space=vmem, size = 0x5000, scoped, tag = 'scratch operand']
  %s0 = inlined_call_operand.vmem [shape: f32[64,16], index: 0, kind: input, shape index: {}]
  %s1 = inlined_call_operand.vmem [shape: f32[16,8], index: 1, kind: input, shape index: {}]
  %s2 = inlined_call_operand.vmem [shape: f32[16,8], index: 2, kind: input, shape index: {}]
  %s3 = inlined_call_operand.vmem [shape: f32[1,8], index: 3, kind: input, shape index: {}]
  %s4 = inlined_call_operand.vmem [shape: f32[3,8,8], index: 4, kind: input, shape index: {}]
  %s5 = inlined_call_operand.vmem [shape: f32[1,8], index: 5, kind: input, shape index: {}]
  %s6 = inlined_call_operand.vmem [shape: f32[3,8,8], index: 6, kind: input, shape index: {}]
  %s7 = inlined_call_operand.vmem [shape: f32[1,8], index: 7, kind: input, shape index: {}]
  %s8 = inlined_call_operand.vmem [shape: f32[64,8], index: 8, kind: output, shape index: {}]
  %s9 = sld [smem:[#allocation0]]
  $region65: #{_lambda_.1} parent=0
    _
  %s11 = ssub.s32 1, %s9
  %s12 = scalar_select 0, %s11, %s9
  loop: start=0, step=1, limit=4
  $region2: #{_lambda_.1} parent=0 // loop_pre_header
    _
  $region3: #{_lambda_.1} parent=0 // loop_header
    %s14 = sphi 0, %s18
    %p15 = scmp.ge.s32.totalorder %s14, 4
    %s24 = sphi 0, %s26
    %s27 = sphi 0, %s24
    %s28 = sphi 0, %s27
    %s44 = sphi 0, %s28
    %s48 = sphi 0, %s48
    %s50 = sphi 0, %s48
    %s51 = sphi 0, %s50
    %s65 = sphi 0, %s51
    %s69 = sphi 0, %s69
    %s71 = sphi 0, %s69
    %s72 = sphi 0, %s71
    %s86 = sphi 0, %s72
    %s90 = sphi 0, %s90
    %s92 = sphi 0, %s90
    %s93 = sphi 0, %s92
    %s107 = sphi 0, %s93
    %s111 = sphi 0, %s111
    %s113 = sphi 0, %s111
    %s114 = sphi 0, %s113
    %s128 = sphi 0, %s114
    %s132 = sphi 0, %s132
    %s134 = sphi 0, %s132
    %s135 = sphi 0, %s134
    %s149 = sphi 0, %s135
    %s153 = sphi 0, %s153
    %s155 = sphi 0, %s153
    %s156 = sphi 0, %s155
    %s170 = sphi 0, %s156
    %s174 = sphi 0, %s174
    %s176 = sphi 0, %s174
    %s177 = sphi 0, %s176
    %s191 = sphi 0, %s177
    %s197 = sphi 0, %s199
    %s200 = sphi 0, %s197
    %s201 = sphi 0, %s200
    %s217 = sphi 0, %s201
  $region4: #{_lambda_.1} parent=0 // loop_header_branch
    %17 = sbr.rel (%p15) target = $region8
  $region5: #{_lambda_.1} parent=0 // loop_body
    %s19 = ssub.s32 %s14, 1
    %s20 = ssub.s32 %s14, 2
    %s21 = sadd.s32 %s14, 1
    %s22 = ssub.s32 %s14, %s21
    %p23 = scmp.eq.s32.totalorder %s22, 0
    %s25 = sadd.s32 %s24, 1
    %s26 = scalar_select %p23, %s24, %s25
    %p29 = pneg %p23
    %p30 = scmp.eq.s32.totalorder %s14, 1
    %p31 = por %p29, %p30
    %p32 = scmp.ne.s32.totalorder %s24, %s27
    %p33 = scmp.eq.s32.totalorder %s14, 0
    %p34 = por %p32, %p33
    %p35 = scmp.ne.s32.totalorder %s24, %s27
    %p36 = scmp.eq.s32.totalorder %s19, 1
    %p37 = por %p35, %p36
    %p38 = scmp.ne.s32.totalorder %s27, %s28
    %p39 = scmp.eq.s32.totalorder %s19, 0
    %p40 = por %p38, %p39
    %p41 = scmp.ne.s32.totalorder %s27, %s28
    %p42 = scmp.eq.s32.totalorder %s20, 1
    %p43 = por %p41, %p42
    %p45 = scmp.ne.s32.totalorder %s28, %s44
    %p46 = scmp.eq.s32.totalorder %s20, 0
    %p47 = por %p45, %p46
    %s49 = sadd.s32 %s48, 1
    %p52 = scmp.eq.s32.totalorder %s14, 1
    %p53 = scmp.ne.s32.totalorder %s48, %s50
    %p54 = scmp.eq.s32.totalorder %s14, 0
    %p55 = por %p53, %p54
    %p56 = scmp.ne.s32.totalorder %s48, %s50
    %p57 = scmp.eq.s32.totalorder %s19, 1
    %p58 = por %p56, %p57
    %p59 = scmp.ne.s32.totalorder %s50, %s51
    %p60 = scmp.eq.s32.totalorder %s19, 0
    %p61 = por %p59, %p60
    %p62 = scmp.ne.s32.totalorder %s50, %s51
    %p63 = scmp.eq.s32.totalorder %s20, 1
    %p64 = por %p62, %p63
    %p66 = scmp.ne.s32.totalorder %s51, %s65
    %p67 = scmp.eq.s32.totalorder %s20, 0
    %p68 = por %p66, %p67
    %s70 = sadd.s32 %s69, 1
    %p73 = scmp.eq.s32.totalorder %s14, 1
    %p74 = scmp.ne.s32.totalorder %s69, %s71
    %p75 = scmp.eq.s32.totalorder %s14, 0
    %p76 = por %p74, %p75
    %p77 = scmp.ne.s32.totalorder %s69, %s71
    %p78 = scmp.eq.s32.totalorder %s19, 1
    %p79 = por %p77, %p78
    %p80 = scmp.ne.s32.totalorder %s71, %s72
    %p81 = scmp.eq.s32.totalorder %s19, 0
    %p82 = por %p80, %p81
    %p83 = scmp.ne.s32.totalorder %s71, %s72
    %p84 = scmp.eq.s32.totalorder %s20, 1
    %p85 = por %p83, %p84
    %p87 = scmp.ne.s32.totalorder %s72, %s86
    %p88 = scmp.eq.s32.totalorder %s20, 0
    %p89 = por %p87, %p88
    %s91 = sadd.s32 %s90, 1
    %p94 = scmp.eq.s32.totalorder %s14, 1
    %p95 = scmp.ne.s32.totalorder %s90, %s92
    %p96 = scmp.eq.s32.totalorder %s14, 0
    %p97 = por %p95, %p96
    %p98 = scmp.ne.s32.totalorder %s90, %s92
    %p99 = scmp.eq.s32.totalorder %s19, 1
    %p100 = por %p98, %p99
    %p101 = scmp.ne.s32.totalorder %s92, %s93
    %p102 = scmp.eq.s32.totalorder %s19, 0
    %p103 = por %p101, %p102
    %p104 = scmp.ne.s32.totalorder %s92, %s93
    %p105 = scmp.eq.s32.totalorder %s20, 1
    %p106 = por %p104, %p105
    %p108 = scmp.ne.s32.totalorder %s93, %s107
    %p109 = scmp.eq.s32.totalorder %s20, 0
    %p110 = por %p108, %p109
    %s112 = sadd.s32 %s111, 1
    %p115 = scmp.eq.s32.totalorder %s14, 1
    %p116 = scmp.ne.s32.totalorder %s111, %s113
    %p117 = scmp.eq.s32.totalorder %s14, 0
    %p118 = por %p116, %p117
    %p119 = scmp.ne.s32.totalorder %s111, %s113
    %p120 = scmp.eq.s32.totalorder %s19, 1
    %p121 = por %p119, %p120
    %p122 = scmp.ne.s32.totalorder %s113, %s114
    %p123 = scmp.eq.s32.totalorder %s19, 0
    %p124 = por %p122, %p123
    %p125 = scmp.ne.s32.totalorder %s113, %s114
    %p126 = scmp.eq.s32.totalorder %s20, 1
    %p127 = por %p125, %p126
    %p129 = scmp.ne.s32.totalorder %s114, %s128
    %p130 = scmp.eq.s32.totalorder %s20, 0
    %p131 = por %p129, %p130
    %s133 = sadd.s32 %s132, 1
    %p136 = scmp.eq.s32.totalorder %s14, 1
    %p137 = scmp.ne.s32.totalorder %s132, %s134
    %p138 = scmp.eq.s32.totalorder %s14, 0
    %p139 = por %p137, %p138
    %p140 = scmp.ne.s32.totalorder %s132, %s134
    %p141 = scmp.eq.s32.totalorder %s19, 1
    %p142 = por %p140, %p141
    %p143 = scmp.ne.s32.totalorder %s134, %s135
    %p144 = scmp.eq.s32.totalorder %s19, 0
    %p145 = por %p143, %p144
    %p146 = scmp.ne.s32.totalorder %s134, %s135
    %p147 = scmp.eq.s32.totalorder %s20, 1
    %p148 = por %p146, %p147
    %p150 = scmp.ne.s32.totalorder %s135, %s149
    %p151 = scmp.eq.s32.totalorder %s20, 0
    %p152 = por %p150, %p151
    %s154 = sadd.s32 %s153, 1
    %p157 = scmp.eq.s32.totalorder %s14, 1
    %p158 = scmp.ne.s32.totalorder %s153, %s155
    %p159 = scmp.eq.s32.totalorder %s14, 0
    %p160 = por %p158, %p159
    %p161 = scmp.ne.s32.totalorder %s153, %s155
    %p162 = scmp.eq.s32.totalorder %s19, 1
    %p163 = por %p161, %p162
    %p164 = scmp.ne.s32.totalorder %s155, %s156
    %p165 = scmp.eq.s32.totalorder %s19, 0
    %p166 = por %p164, %p165
    %p167 = scmp.ne.s32.totalorder %s155, %s156
    %p168 = scmp.eq.s32.totalorder %s20, 1
    %p169 = por %p167, %p168
    %p171 = scmp.ne.s32.totalorder %s156, %s170
    %p172 = scmp.eq.s32.totalorder %s20, 0
    %p173 = por %p171, %p172
    %s175 = sadd.s32 %s174, 1
    %p178 = scmp.eq.s32.totalorder %s14, 1
    %p179 = scmp.ne.s32.totalorder %s174, %s176
    %p180 = scmp.eq.s32.totalorder %s14, 0
    %p181 = por %p179, %p180
    %p182 = scmp.ne.s32.totalorder %s174, %s176
    %p183 = scmp.eq.s32.totalorder %s19, 1
    %p184 = por %p182, %p183
    %p185 = scmp.ne.s32.totalorder %s176, %s177
    %p186 = scmp.eq.s32.totalorder %s19, 0
    %p187 = por %p185, %p186
    %p188 = scmp.ne.s32.totalorder %s176, %s177
    %p189 = scmp.eq.s32.totalorder %s20, 1
    %p190 = por %p188, %p189
    %p192 = scmp.ne.s32.totalorder %s177, %s191
    %p193 = scmp.eq.s32.totalorder %s20, 0
    %p194 = por %p192, %p193
    %s195 = ssub.s32 %s14, %s21
    %p196 = scmp.eq.s32.totalorder %s195, 0
    %s198 = sadd.s32 %s197, 1
    %s199 = scalar_select %p196, %s197, %s198
    %p202 = pneg %p196
    %p203 = scmp.eq.s32.totalorder %s14, 1
    %p204 = por %p202, %p203
    %p205 = scmp.ne.s32.totalorder %s197, %s200
    %p206 = scmp.eq.s32.totalorder %s14, 0
    %p207 = por %p205, %p206
    %p208 = scmp.ne.s32.totalorder %s197, %s200
    %p209 = scmp.eq.s32.totalorder %s19, 1
    %p210 = por %p208, %p209
    %p211 = scmp.ne.s32.totalorder %s200, %s201
    %p212 = scmp.eq.s32.totalorder %s19, 0
    %p213 = por %p211, %p212
    %p214 = scmp.ne.s32.totalorder %s200, %s201
    %p215 = scmp.eq.s32.totalorder %s20, 1
    %p216 = por %p214, %p215
    %p218 = scmp.ne.s32.totalorder %s201, %s217
    %p219 = scmp.eq.s32.totalorder %s20, 0
    %p220 = por %p218, %p219
    %p221 = scmp.le.s32.totalorder 1, %s14
    %p222 = scmp.lt.s32.totalorder %s14, 3
    %p223 = pnand %p221, %p222
    %p224 = pneg %p223
    // Predicated region
    $region9: #{_lambda_.1} parent=5 // pred_check
      _
    $region10: #{_lambda_.1} parent=5 // pred_check_branch
      %226 = sbr.rel (%p223) target = $region12
    $region11: #{_lambda_.1} parent=5 // pred_region
      %s227 = ssub.s32 %s14, 1
      // Predicated region
      $region13: #{_lambda_.1} parent=11 // pred_check
        %p228 = pneg %p61
      $region14: #{_lambda_.1} parent=11 // pred_check_branch
        %230 = sbr.rel (%p228) target = $region16
      $region15: #{_lambda_.1} parent=11 // pred_region
        _
      $region16: #{_lambda_.1} parent=11 // pred_fallthru
        _
      // Predicated region
      $region17: #{_lambda_.1} parent=11 // pred_check
        %p231 = pneg %p82
      $region18: #{_lambda_.1} parent=11 // pred_check_branch
        %233 = sbr.rel (%p231) target = $region20
      $region19: #{_lambda_.1} parent=11 // pred_region
        _
      $region20: #{_lambda_.1} parent=11 // pred_fallthru
        _
      // Predicated region
      $region21: #{_lambda_.1} parent=11 // pred_check
        %p234 = pneg %p103
      $region22: #{_lambda_.1} parent=11 // pred_check_branch
        %236 = sbr.rel (%p234) target = $region24
      $region23: #{_lambda_.1} parent=11 // pred_region
        _
      $region24: #{_lambda_.1} parent=11 // pred_fallthru
        _
      // Predicated region
      $region25: #{_lambda_.1} parent=11 // pred_check
        %p237 = pneg %p124
      $region26: #{_lambda_.1} parent=11 // pred_check_branch
        %239 = sbr.rel (%p237) target = $region28
      $region27: #{_lambda_.1} parent=11 // pred_region
        _
      $region28: #{_lambda_.1} parent=11 // pred_fallthru
        _
      // Predicated region
      $region29: #{_lambda_.1} parent=11 // pred_check
        %p240 = pneg %p145
      $region30: #{_lambda_.1} parent=11 // pred_check_branch
        %242 = sbr.rel (%p240) target = $region32
      $region31: #{_lambda_.1} parent=11 // pred_region
        _
      $region32: #{_lambda_.1} parent=11 // pred_fallthru
        _
      // Predicated region
      $region33: #{_lambda_.1} parent=11 // pred_check
        %p243 = pneg %p166
      $region34: #{_lambda_.1} parent=11 // pred_check_branch
        %245 = sbr.rel (%p243) target = $region36
      $region35: #{_lambda_.1} parent=11 // pred_region
        _
      $region36: #{_lambda_.1} parent=11 // pred_fallthru
        _
      // Predicated region
      $region37: #{_lambda_.1} parent=11 // pred_check
        %p246 = pneg %p187
      $region38: #{_lambda_.1} parent=11 // pred_check_branch
        %248 = sbr.rel (%p246) target = $region40
      $region39: #{_lambda_.1} parent=11 // pred_region
        _
      $region40: #{_lambda_.1} parent=11 // pred_fallthru
        _
    $region12: #{_lambda_.1} parent=5 // pred_fallthru
      _
    %p249 = scmp.lt.s32.totalorder %s14, 2
    // Predicated region
    $region41: #{_lambda_.1} parent=5 // pred_check
      %p250 = pneg %p249
    $region42: #{_lambda_.1} parent=5 // pred_check_branch
      %252 = sbr.rel (%p250) target = $region44
    $region43: #{_lambda_.1} parent=5 // pred_region
      // Predicated region
      $region45: #{_lambda_.1} parent=43 // pred_check
        %p253 = pneg %p34
      $region46: #{_lambda_.1} parent=43 // pred_check_branch
        %255 = sbr.rel (%p253) target = $region48
      $region47: #{_lambda_.1} parent=43 // pred_region
        %s256 = smul.u32 4, %s14
        %p257 = scmp.lt.s32.totalorder %s256, 7
        %s258 = scalar_select %p257, %s256, 7
        %s259 = smul.addr %s258, 8
        %s260 = scalar_lea.vmem %s0, %s259
        %s261 = smul.u32 4, %s14
      $region48: #{_lambda_.1} parent=43 // pred_fallthru
        _
    $region44: #{_lambda_.1} parent=5 // pred_fallthru
      _
    %p262 = scmp.le.s32.totalorder 1, %s14
    %p263 = scmp.lt.s32.totalorder %s14, 3
    %p264 = pnand %p262, %p263
    %p265 = pneg %p264
    // Predicated region
    $region49: #{_lambda_.1} parent=5 // pred_check
      _
    $region50: #{_lambda_.1} parent=5 // pred_check_branch
      %267 = sbr.rel (%p264) target = $region52
    $region51: #{_lambda_.1} parent=5 // pred_region
      %s268 = ssub.s32 %s14, 1
      %s269 = smul.u32 4, %s19
      %p270 = scmp.lt.s32.totalorder %s269, 7
      %s271 = scalar_select %p270, %s269, 7
      %s272 = smul.addr %s271, 8
      %s273 = scalar_lea.vmem %s0, %s272
      %p274 = pneg %p40
      %p275 = pneg %p37
      %p276 = pneg %p61
      %p277 = pneg %p58
      %p278 = pneg %p82
      %p279 = pneg %p79
      %p280 = pneg %p103
      %p281 = pneg %p100
      %p282 = pneg %p124
      %p283 = pneg %p121
      %p284 = pneg %p145
      %p285 = pneg %p142
      %p286 = pneg %p166
      %p287 = pneg %p163
      %p288 = pneg %p187
      %p289 = pneg %p184
      %p290 = pneg %p213
      %p291 = pneg %p210
      %s292 = smul.u32 4, %s19
      %p293 = scmp.lt.s32.totalorder %s292, 7
      %s294 = scalar_select %p293, %s292, 7
      %s295 = smul.addr %s294, 8
      %s296 = scalar_lea.vmem %s8, %s295
      %s297 = smul.u32 4, %s19
      %p298 = scmp.lt.s32.totalorder %s297, 7
      %s299 = scalar_select %p298, %s297, 7
      %s300 = smul.addr %s299, 8
      %s301 = scalar_lea.vmem %s0, %s300
      %s302 = smul.u32 4, %s19
      %s303 = smul.u32 4, %s19
      %p304 = scmp.lt.s32.totalorder %s303, 7
      %s305 = scalar_select %p304, %s303, 7
      %s306 = smul.addr %s305, 8
      %s307 = scalar_lea.vmem %s8, %s306
      %s308 = smul.u32 4, %s19
      %vm309 = vcmask 57344
      %310 = vst.msk [vmem:[#allocation2] sm:$0x1] %vm309, 0.0
      %311 = vst.msk [vmem:[#allocation2 + $0x20] sm:$0x1] %vm309, 0.0
      %v312 = vlaneseq
      %v313 = vshrl.u32 %v312, 7
      %v314 = vadd.s32 %v313, 8
      %v315 = vadd.s32 %v313, 16
      %v316 = vadd.s32 %v313, 24
      %vm317 = vcmp.lt.s32.totalorder %v313, 0
      %v318 = vsub.s32 0, %v313
      %v319 = vsel %vm317, %v318, %v313
      %v320 = vshrl.u32 %v319, 4
      %v321 = vand.u32 %v319, 15
      %v322 = vsub.s32 0, %v321
      %v323 = vsel %vm317, %v322, %v321
      %vm324 = vcmp.lt.s32.totalorder %v314, 0
      %v325 = vsub.s32 0, %v314
      %v326 = vsel %vm324, %v325, %v314
      %v327 = vshrl.u32 %v326, 4
      %v328 = vand.u32 %v326, 15
      %v329 = vsub.s32 0, %v328
      %v330 = vsel %vm324, %v329, %v328
      %vm331 = vcmp.lt.s32.totalorder %v315, 0
      %v332 = vsub.s32 0, %v315
      %v333 = vsel %vm331, %v332, %v315
      %v334 = vshrl.u32 %v333, 4
      %v335 = vand.u32 %v333, 15
      %v336 = vsub.s32 0, %v335
      %v337 = vsel %vm331, %v336, %v335
      %vm338 = vcmp.lt.s32.totalorder %v316, 0
      %v339 = vsub.s32 0, %v316
      %v340 = vsel %vm338, %v339, %v316
      %v341 = vshrl.u32 %v340, 4
      %v342 = vand.u32 %v340, 15
      %v343 = vsub.s32 0, %v342
      %v344 = vsel %vm338, %v343, %v342
      %vm345 = vcmp.ne.s32.totalorder %v323, 0
      %vm346 = vcmp.ne.s32.totalorder %v330, 0
      %vm347 = vcmp.ne.s32.totalorder %v337, 0
      %vm348 = vcmp.ne.s32.totalorder %v344, 0
      %vm349 = vcmp.lt.s32.totalorder %v323, 0
      %vm350 = vcmp.lt.s32.totalorder %v330, 0
      %vm351 = vcmp.lt.s32.totalorder %v337, 0
      %vm352 = vcmp.lt.s32.totalorder %v344, 0
      %vm353 = vmand %vm349, %vm345
      %vm354 = vmand %vm350, %vm346
      %vm355 = vmand %vm351, %vm347
      %vm356 = vmand %vm352, %vm348
      %v357 = vadd.s32 %v323, 16
      %v358 = vadd.s32 %v330, 16
      %v359 = vadd.s32 %v337, 16
      %v360 = vadd.s32 %v344, 16
      %v361 = vsel %vm353, %v357, %v323
      %v362 = vsel %vm354, %v358, %v330
      %v363 = vsel %vm355, %v359, %v337
      %v364 = vsel %vm356, %v360, %v344
      %vm365 = vcmp.lt.s32.totalorder %v361, 9
      %vm366 = vcmp.lt.s32.totalorder %v362, 9
      %vm367 = vcmp.lt.s32.totalorder %v363, 9
      %vm368 = vcmp.lt.s32.totalorder %v364, 9
      %v369 = vld [vmem:[%s3] sm:$0x1]
      %v370 = vld [vmem:[%s5] sm:$0x1]
      %v371 = vld [vmem:[%s7] sm:$0x1]
      %v372 = vld [vmem:[%s301] sm:$0xff]
      %v373 = vld [vmem:[%s301 + $0x8] sm:$0xff]
      %v374 = vld [vmem:[%s301 + $0x10] sm:$0xff]
      %v375 = vld [vmem:[%s301 + $0x18] sm:$0x7f]
      %v376 = vld [vmem:[%s1] sm:$0xff]
      %v377 = vld [vmem:[%s1 + $0x8] sm:$0xff]
      %v378 = vld [vmem:[%s301 + $0x1] sm:$0xff]
      %v379 = vld [vmem:[%s301 + $0x9] sm:$0xff]
      %v380 = vld [vmem:[%s301 + $0x11] sm:$0xff]
      %v381 = vld [vmem:[%s301 + $0x19] sm:$0x7f]
      %v382 = vld [vmem:[%s2] sm:$0xff]
      %v383 = vld [vmem:[%s2 + $0x8] sm:$0xff]
      %vm384 = vcmask 130048
      %v386 = vsel %vm384, %v378, 0
      %v389 = vsel %vm384, %v379, 0
      %v392 = vsel %vm384, %v380, 0
      %v395 = vsel %vm384, %v381, 0
      %397 = vmatprep.subr.mxu0 0.0
      %398 = vmatpush1.msra.mxu0 0.0
      %399 = vmatprep.subr.mxu0 0.0
      %400 = vmatpush1.msra.mxu0 0.0
      %401 = vmatprep.subr.mxu0 0.0
      %402 = vmatpush1.msra.mxu0 0.0
      %403 = vmatprep.subr.mxu0 0.0
      %404 = vmatpush1.msra.mxu0 0.0
      %405 = vmatprep.subr.mxu0 0.0
      %406 = vmatpush1.msra.mxu0 0.0
      %407 = vmatprep.subr.mxu0 0.0
      %408 = vmatpush1.msra.mxu0 0.0
      %409 = vmatprep.subr.mxu0 0.0
      %410 = vmatpush1.msra.mxu0 0.0
      %411 = vmatprep.subr.mxu0 0.0
      %412 = vmatpush1.msra.mxu0 0.0
      %413 = vmatprep.subr.mxu0 0.0
      %414 = vmatpush1.msra.mxu0 0.0
      %415 = vmatprep.subr.mxu0 0.0
      %416 = vmatpush1.msra.mxu0 0.0
      %417 = vmatprep.subr.mxu0 0.0
      %418 = vmatpush1.msra.mxu0 0.0
      %419 = vmatprep.subr.mxu0 0.0
      %420 = vmatpush1.msra.mxu0 0.0
      %421 = vmatprep.subr.mxu0 0.0
      %422 = vmatpush1.msra.mxu0 0.0
      %423 = vmatprep.subr.mxu0 0.0
      %424 = vmatpush1.msra.mxu0 0.0
      %425 = vmatprep.subr.mxu0 0.0
      %426 = vmatpush1.msra.mxu0 %v383
      %427 = vmatprep.subr.mxu0 0.0
      %428 = vmatpush1.msra.mxu0 %v382
      %429 = vmatprep.subr.mxu0 0.0
      %430 = vmatpush2.msra.mxu0 0.0
      %431 = vmatprep.subr.mxu0 0.0
      %432 = vmatpush2.msra.mxu0 0.0
      %433 = vmatprep.subr.mxu0 0.0
      %434 = vmatpush2.msra.mxu0 0.0
      %435 = vmatprep.subr.mxu0 0.0
      %436 = vmatpush2.msra.mxu0 0.0
      %437 = vmatprep.subr.mxu0 0.0
      %438 = vmatpush2.msra.mxu0 0.0
      %439 = vmatprep.subr.mxu0 0.0
      %440 = vmatpush2.msra.mxu0 0.0
      %441 = vmatprep.subr.mxu0 0.0
      %442 = vmatpush2.msra.mxu0 0.0
      %443 = vmatprep.subr.mxu0 0.0
      %444 = vmatpush2.msra.mxu0 0.0
      %445 = vmatprep.subr.mxu0 0.0
      %446 = vmatpush2.msra.mxu0 0.0
      %447 = vmatprep.subr.mxu0 0.0
      %448 = vmatpush2.msra.mxu0 0.0
      %449 = vmatprep.subr.mxu0 0.0
      %450 = vmatpush2.msra.mxu0 0.0
      %451 = vmatprep.subr.mxu0 0.0
      %452 = vmatpush2.msra.mxu0 0.0
      %453 = vmatprep.subr.mxu0 0.0
      %454 = vmatpush2.msra.mxu0 0.0
      %455 = vmatprep.subr.mxu0 0.0
      %456 = vmatpush2.msra.mxu0 0.0
      %457 = vmatprep.subr.mxu0 0.0
      %458 = vmatpush2.msra.mxu0 0.0
      %459 = vmatprep.subr.mxu0 0.0
      %460 = vmatpush2.msra.mxu0 0.0
      %461 = vmatprep.mubr.f32.mxu0 0.0
      %462 = vmatmul.mubr.f32.gmra.mxu0 %v386
      %v463 = vpop.f32.mrf.mxu0
      %v464 = vadd.f32 0.0, %v463
      %v465 = vpop.f32.mrf.mxu0
      %466 = vmatprep.mubr.f32.mxu0 0.0
      %467 = vmatmul.mubr.f32.gmra.mxu0 %v389
      %v468 = vpop.f32.mrf.mxu0
      %v469 = vadd.f32 0.0, %v468
      %v470 = vpop.f32.mrf.mxu0
      %471 = vmatprep.mubr.f32.mxu0 0.0
      %472 = vmatmul.mubr.f32.gmra.mxu0 %v392
      %v473 = vpop.f32.mrf.mxu0
      %v474 = vadd.f32 0.0, %v473
      %v475 = vpop.f32.mrf.mxu0
      %476 = vmatprep.mubr.f32.mxu0 0.0
      %477 = vmatmul.mubr.f32.gmra.mxu0 %v395
      %v478 = vpop.f32.mrf.mxu0
      %v479 = vadd.f32 0.0, %v478
      %v480 = vpop.f32.mrf.mxu0
      %481 = vdwg.mxu0
      %v483 = vsel %vm384, %v372, 0
      %v486 = vsel %vm384, %v373, 0
      %v489 = vsel %vm384, %v374, 0
      %v492 = vsel %vm384, %v375, 0
      %494 = vmatprep.subr.mxu0 0.0
      %495 = vmatpush1.msra.mxu0 0.0
      %496 = vmatprep.subr.mxu0 0.0
      %497 = vmatpush1.msra.mxu0 0.0
      %498 = vmatprep.subr.mxu0 0.0
      %499 = vmatpush1.msra.mxu0 0.0
      %500 = vmatprep.subr.mxu0 0.0
      %501 = vmatpush1.msra.mxu0 0.0
      %502 = vmatprep.subr.mxu0 0.0
      %503 = vmatpush1.msra.mxu0 0.0
      %504 = vmatprep.subr.mxu0 0.0
      %505 = vmatpush1.msra.mxu0 0.0
      %506 = vmatprep.subr.mxu0 0.0
      %507 = vmatpush1.msra.mxu0 0.0
      %508 = vmatprep.subr.mxu0 0.0
      %509 = vmatpush1.msra.mxu0 0.0
      %510 = vmatprep.subr.mxu0 0.0
      %511 = vmatpush1.msra.mxu0 0.0
      %512 = vmatprep.subr.mxu0 0.0
      %513 = vmatpush1.msra.mxu0 0.0
      %514 = vmatprep.subr.mxu0 0.0
      %515 = vmatpush1.msra.mxu0 0.0
      %516 = vmatprep.subr.mxu0 0.0
      %517 = vmatpush1.msra.mxu0 0.0
      %518 = vmatprep.subr.mxu0 0.0
      %519 = vmatpush1.msra.mxu0 0.0
      %520 = vmatprep.subr.mxu0 0.0
      %521 = vmatpush1.msra.mxu0 0.0
      %522 = vmatprep.subr.mxu0 0.0
      %523 = vmatpush1.msra.mxu0 %v377
      %524 = vmatprep.subr.mxu0 0.0
      %525 = vmatpush1.msra.mxu0 %v376
      %526 = vmatprep.subr.mxu0 0.0
      %527 = vmatpush2.msra.mxu0 0.0
      %528 = vmatprep.subr.mxu0 0.0
      %529 = vmatpush2.msra.mxu0 0.0
      %530 = vmatprep.subr.mxu0 0.0
      %531 = vmatpush2.msra.mxu0 0.0
      %532 = vmatprep.subr.mxu0 0.0
      %533 = vmatpush2.msra.mxu0 0.0
      %534 = vmatprep.subr.mxu0 0.0
      %535 = vmatpush2.msra.mxu0 0.0
      %536 = vmatprep.subr.mxu0 0.0
      %537 = vmatpush2.msra.mxu0 0.0
      %538 = vmatprep.subr.mxu0 0.0
      %539 = vmatpush2.msra.mxu0 0.0
      %540 = vmatprep.subr.mxu0 0.0
      %541 = vmatpush2.msra.mxu0 0.0
      %542 = vmatprep.subr.mxu0 0.0
      %543 = vmatpush2.msra.mxu0 0.0
      %544 = vmatprep.subr.mxu0 0.0
      %545 = vmatpush2.msra.mxu0 0.0
      %546 = vmatprep.subr.mxu0 0.0
      %547 = vmatpush2.msra.mxu0 0.0
      %548 = vmatprep.subr.mxu0 0.0
      %549 = vmatpush2.msra.mxu0 0.0
      %550 = vmatprep.subr.mxu0 0.0
      %551 = vmatpush2.msra.mxu0 0.0
      %552 = vmatprep.subr.mxu0 0.0
      %553 = vmatpush2.msra.mxu0 0.0
      %554 = vmatprep.subr.mxu0 0.0
      %555 = vmatpush2.msra.mxu0 0.0
      %556 = vmatprep.subr.mxu0 0.0
      %557 = vmatpush2.msra.mxu0 0.0
      %558 = vmatprep.mubr.f32.mxu0 0.0
      %559 = vmatmul.mubr.f32.gmra.mxu0 %v483
      %v560 = vpop.f32.mrf.mxu0
      %v561 = vadd.f32 %v464, %v560
      %v562 = vpop.f32.mrf.mxu0
      %563 = vmatprep.mubr.f32.mxu0 0.0
      %564 = vmatmul.mubr.f32.gmra.mxu0 %v486
      %v565 = vpop.f32.mrf.mxu0
      %v566 = vadd.f32 %v469, %v565
      %v567 = vpop.f32.mrf.mxu0
      %568 = vmatprep.mubr.f32.mxu0 0.0
      %569 = vmatmul.mubr.f32.gmra.mxu0 %v489
      %v570 = vpop.f32.mrf.mxu0
      %v571 = vadd.f32 %v474, %v570
      %v572 = vpop.f32.mrf.mxu0
      %573 = vmatprep.mubr.f32.mxu0 0.0
      %574 = vmatmul.mubr.f32.gmra.mxu0 %v492
      %v575 = vpop.f32.mrf.mxu0
      %v576 = vadd.f32 %v479, %v575
      %v577 = vpop.f32.mrf.mxu0
      %578 = vdwg.mxu0
      %v580 = vlaneseq
      %v581 = vshrl.u32 %v580, 7
      %v582 = vsub.s32 0, %v581
      %v583 = vrot.slane %v369, %v582
      %v585 = vadd.f32 %v561, %v583
      %v586 = vadd.f32 %v566, %v583
      %v587 = vadd.f32 %v571, %v583
      %v588 = vadd.f32 %v576, %v583
      %v589 = vmax.f32 %v585, 0.0
      %v590 = vmax.f32 %v586, 0.0
      %v591 = vmax.f32 %v587, 0.0
      %v592 = vmax.f32 %v588, 0.0
      %v593 = vsel %vm365, 1, 0
      %v594 = vsel %vm366, 1, 0
      %v595 = vsel %vm367, 1, 0
      %v596 = vsel %vm368, 1, 0
      %vm597 = vcmp.eq.s32.totalorder %v593, 1
      %vm598 = vcmp.eq.s32.totalorder %v594, 1
      %vm599 = vcmp.eq.s32.totalorder %v595, 1
      %vm600 = vcmp.eq.s32.totalorder %v596, 1
      %v601 = vsel %vm597, %v589, 0.0
      %v602 = vsel %vm598, %v590, 0.0
      %v603 = vsel %vm599, %v591, 0.0
      %v604 = vsel %vm600, %v592, 0.0
      %vm605 = vcmask 64512
      %606 = vst.msk [vmem:[#allocation2 + $0x1] sm:$0xff] %vm605, %v601
      %607 = vst.msk [vmem:[#allocation2 + $0x9] sm:$0xff] %vm605, %v602
      %608 = vst.msk [vmem:[#allocation2 + $0x11] sm:$0xff] %vm605, %v603
      %vm609 = vcmask 63488
      %610 = vst.msk [vmem:[#allocation2 + $0x19] sm:$0x7f] %vm609, %v604
      %v611 = vld [vmem:[#allocation2] sm:$0xff]
      %v612 = vld [vmem:[#allocation2 + $0x8] sm:$0xff]
      %v613 = vld [vmem:[#allocation2 + $0x10] sm:$0xff]
      %v614 = vld [vmem:[#allocation2 + $0x18] sm:$0x7f]
      %v615 = vld [vmem:[%s4] sm:$0xff]
      %s616 = scalar_lea.vmem %s4, 8
      %v617 = vld [vmem:[%s616] sm:$0xff]
      %v619 = vsel %vm605, %v601, 0
      %v622 = vsel %vm605, %v602, 0
      %v625 = vsel %vm605, %v603, 0
      %v628 = vsel %vm605, %v604, 0
      %630 = vmatprep.subr.mxu0 0.0
      %631 = vmatpush1.msra.mxu0 0.0
      %632 = vmatprep.subr.mxu0 0.0
      %633 = vmatpush1.msra.mxu0 0.0
      %634 = vmatprep.subr.mxu0 0.0
      %635 = vmatpush1.msra.mxu0 0.0
      %636 = vmatprep.subr.mxu0 0.0
      %637 = vmatpush1.msra.mxu0 0.0
      %638 = vmatprep.subr.mxu0 0.0
      %639 = vmatpush1.msra.mxu0 0.0
      %640 = vmatprep.subr.mxu0 0.0
      %641 = vmatpush1.msra.mxu0 0.0
      %642 = vmatprep.subr.mxu0 0.0
      %643 = vmatpush1.msra.mxu0 0.0
      %644 = vmatprep.subr.mxu0 0.0
      %645 = vmatpush1.msra.mxu0 0.0
      %646 = vmatprep.subr.mxu0 0.0
      %647 = vmatpush1.msra.mxu0 0.0
      %648 = vmatprep.subr.mxu0 0.0
      %649 = vmatpush1.msra.mxu0 0.0
      %650 = vmatprep.subr.mxu0 0.0
      %651 = vmatpush1.msra.mxu0 0.0
      %652 = vmatprep.subr.mxu0 0.0
      %653 = vmatpush1.msra.mxu0 0.0
      %654 = vmatprep.subr.mxu0 0.0
      %655 = vmatpush1.msra.mxu0 0.0
      %656 = vmatprep.subr.mxu0 0.0
      %657 = vmatpush1.msra.mxu0 0.0
      %658 = vmatprep.subr.mxu0 0.0
      %659 = vmatpush1.msra.mxu0 0.0
      %660 = vmatprep.subr.mxu0 0.0
      %661 = vmatpush1.msra.mxu0 %v617
      %662 = vmatprep.subr.mxu0 0.0
      %663 = vmatpush2.msra.mxu0 0.0
      %664 = vmatprep.subr.mxu0 0.0
      %665 = vmatpush2.msra.mxu0 0.0
      %666 = vmatprep.subr.mxu0 0.0
      %667 = vmatpush2.msra.mxu0 0.0
      %668 = vmatprep.subr.mxu0 0.0
      %669 = vmatpush2.msra.mxu0 0.0
      %670 = vmatprep.subr.mxu0 0.0
      %671 = vmatpush2.msra.mxu0 0.0
      %672 = vmatprep.subr.mxu0 0.0
      %673 = vmatpush2.msra.mxu0 0.0
      %674 = vmatprep.subr.mxu0 0.0
      %675 = vmatpush2.msra.mxu0 0.0
      %676 = vmatprep.subr.mxu0 0.0
      %677 = vmatpush2.msra.mxu0 0.0
      %678 = vmatprep.subr.mxu0 0.0
      %679 = vmatpush2.msra.mxu0 0.0
      %680 = vmatprep.subr.mxu0 0.0
      %681 = vmatpush2.msra.mxu0 0.0
      %682 = vmatprep.subr.mxu0 0.0
      %683 = vmatpush2.msra.mxu0 0.0
      %684 = vmatprep.subr.mxu0 0.0
      %685 = vmatpush2.msra.mxu0 0.0
      %686 = vmatprep.subr.mxu0 0.0
      %687 = vmatpush2.msra.mxu0 0.0
      %688 = vmatprep.subr.mxu0 0.0
      %689 = vmatpush2.msra.mxu0 0.0
      %690 = vmatprep.subr.mxu0 0.0
      %691 = vmatpush2.msra.mxu0 0.0
      %692 = vmatprep.subr.mxu0 0.0
      %693 = vmatpush2.msra.mxu0 0.0
      %694 = vmatprep.mubr.f32.mxu0 0.0
      %695 = vmatmul.mubr.f32.gmra.mxu0 %v619
      %v696 = vpop.f32.mrf.mxu0
      %v697 = vadd.f32 0.0, %v696
      %v698 = vpop.f32.mrf.mxu0
      %699 = vmatprep.mubr.f32.mxu0 0.0
      %700 = vmatmul.mubr.f32.gmra.mxu0 %v622
      %v701 = vpop.f32.mrf.mxu0
      %v702 = vadd.f32 0.0, %v701
      %v703 = vpop.f32.mrf.mxu0
      %704 = vmatprep.mubr.f32.mxu0 0.0
      %705 = vmatmul.mubr.f32.gmra.mxu0 %v625
      %v706 = vpop.f32.mrf.mxu0
      %v707 = vadd.f32 0.0, %v706
      %v708 = vpop.f32.mrf.mxu0
      %709 = vmatprep.mubr.f32.mxu0 0.0
      %710 = vmatmul.mubr.f32.gmra.mxu0 %v628
      %v711 = vpop.f32.mrf.mxu0
      %v712 = vadd.f32 0.0, %v711
      %v713 = vpop.f32.mrf.mxu0
      %714 = vdwg.mxu0
      %v716 = vsel %vm605, %v611, 0
      %v719 = vsel %vm605, %v612, 0
      %v722 = vsel %vm605, %v613, 0
      %v725 = vsel %vm605, %v614, 0
      %727 = vmatprep.subr.mxu0 0.0
      %728 = vmatpush1.msra.mxu0 0.0
      %729 = vmatprep.subr.mxu0 0.0
      %730 = vmatpush1.msra.mxu0 0.0
      %731 = vmatprep.subr.mxu0 0.0
      %732 = vmatpush1.msra.mxu0 0.0
      %733 = vmatprep.subr.mxu0 0.0
      %734 = vmatpush1.msra.mxu0 0.0
      %735 = vmatprep.subr.mxu0 0.0
      %736 = vmatpush1.msra.mxu0 0.0
      %737 = vmatprep.subr.mxu0 0.0
      %738 = vmatpush1.msra.mxu0 0.0
      %739 = vmatprep.subr.mxu0 0.0
      %740 = vmatpush1.msra.mxu0 0.0
      %741 = vmatprep.subr.mxu0 0.0
      %742 = vmatpush1.msra.mxu0 0.0
      %743 = vmatprep.subr.mxu0 0.0
      %744 = vmatpush1.msra.mxu0 0.0
      %745 = vmatprep.subr.mxu0 0.0
      %746 = vmatpush1.msra.mxu0 0.0
      %747 = vmatprep.subr.mxu0 0.0
      %748 = vmatpush1.msra.mxu0 0.0
      %749 = vmatprep.subr.mxu0 0.0
      %750 = vmatpush1.msra.mxu0 0.0
      %751 = vmatprep.subr.mxu0 0.0
      %752 = vmatpush1.msra.mxu0 0.0
      %753 = vmatprep.subr.mxu0 0.0
      %754 = vmatpush1.msra.mxu0 0.0
      %755 = vmatprep.subr.mxu0 0.0
      %756 = vmatpush1.msra.mxu0 0.0
      %757 = vmatprep.subr.mxu0 0.0
      %758 = vmatpush1.msra.mxu0 %v615
      %759 = vmatprep.subr.mxu0 0.0
      %760 = vmatpush2.msra.mxu0 0.0
      %761 = vmatprep.subr.mxu0 0.0
      %762 = vmatpush2.msra.mxu0 0.0
      %763 = vmatprep.subr.mxu0 0.0
      %764 = vmatpush2.msra.mxu0 0.0
      %765 = vmatprep.subr.mxu0 0.0
      %766 = vmatpush2.msra.mxu0 0.0
      %767 = vmatprep.subr.mxu0 0.0
      %768 = vmatpush2.msra.mxu0 0.0
      %769 = vmatprep.subr.mxu0 0.0
      %770 = vmatpush2.msra.mxu0 0.0
      %771 = vmatprep.subr.mxu0 0.0
      %772 = vmatpush2.msra.mxu0 0.0
      %773 = vmatprep.subr.mxu0 0.0
      %774 = vmatpush2.msra.mxu0 0.0
      %775 = vmatprep.subr.mxu0 0.0
      %776 = vmatpush2.msra.mxu0 0.0
      %777 = vmatprep.subr.mxu0 0.0
      %778 = vmatpush2.msra.mxu0 0.0
      %779 = vmatprep.subr.mxu0 0.0
      %780 = vmatpush2.msra.mxu0 0.0
      %781 = vmatprep.subr.mxu0 0.0
      %782 = vmatpush2.msra.mxu0 0.0
      %783 = vmatprep.subr.mxu0 0.0
      %784 = vmatpush2.msra.mxu0 0.0
      %785 = vmatprep.subr.mxu0 0.0
      %786 = vmatpush2.msra.mxu0 0.0
      %787 = vmatprep.subr.mxu0 0.0
      %788 = vmatpush2.msra.mxu0 0.0
      %789 = vmatprep.subr.mxu0 0.0
      %790 = vmatpush2.msra.mxu0 0.0
      %791 = vmatprep.mubr.f32.mxu0 0.0
      %792 = vmatmul.mubr.f32.gmra.mxu0 %v716
      %v793 = vpop.f32.mrf.mxu0
      %v794 = vadd.f32 %v697, %v793
      %v795 = vpop.f32.mrf.mxu0
      %796 = vmatprep.mubr.f32.mxu0 0.0
      %797 = vmatmul.mubr.f32.gmra.mxu0 %v719
      %v798 = vpop.f32.mrf.mxu0
      %v799 = vadd.f32 %v702, %v798
      %v800 = vpop.f32.mrf.mxu0
      %801 = vmatprep.mubr.f32.mxu0 0.0
      %802 = vmatmul.mubr.f32.gmra.mxu0 %v722
      %v803 = vpop.f32.mrf.mxu0
      %v804 = vadd.f32 %v707, %v803
      %v805 = vpop.f32.mrf.mxu0
      %806 = vmatprep.mubr.f32.mxu0 0.0
      %807 = vmatmul.mubr.f32.gmra.mxu0 %v725
      %v808 = vpop.f32.mrf.mxu0
      %v809 = vadd.f32 %v712, %v808
      %v810 = vpop.f32.mrf.mxu0
      %811 = vdwg.mxu0
      %v812 = vld [vmem:[#allocation2 + $0x2] sm:$0xff]
      %v813 = vld [vmem:[#allocation2 + $0xa] sm:$0xff]
      %v814 = vld [vmem:[#allocation2 + $0x12] sm:$0xff]
      %v815 = vld [vmem:[#allocation2 + $0x1a] sm:$0x7f]
      %s816 = scalar_lea.vmem %s4, 16
      %v817 = vld [vmem:[%s816] sm:$0xff]
      %v819 = vsel %vm605, %v812, 0
      %v822 = vsel %vm605, %v813, 0
      %v825 = vsel %vm605, %v814, 0
      %v828 = vsel %vm605, %v815, 0
      %830 = vmatprep.subr.mxu0 0.0
      %831 = vmatpush1.msra.mxu0 0.0
      %832 = vmatprep.subr.mxu0 0.0
      %833 = vmatpush1.msra.mxu0 0.0
      %834 = vmatprep.subr.mxu0 0.0
      %835 = vmatpush1.msra.mxu0 0.0
      %836 = vmatprep.subr.mxu0 0.0
      %837 = vmatpush1.msra.mxu0 0.0
      %838 = vmatprep.subr.mxu0 0.0
      %839 = vmatpush1.msra.mxu0 0.0
      %840 = vmatprep.subr.mxu0 0.0
      %841 = vmatpush1.msra.mxu0 0.0
      %842 = vmatprep.subr.mxu0 0.0
      %843 = vmatpush1.msra.mxu0 0.0
      %844 = vmatprep.subr.mxu0 0.0
      %845 = vmatpush1.msra.mxu0 0.0
      %846 = vmatprep.subr.mxu0 0.0
      %847 = vmatpush1.msra.mxu0 0.0
      %848 = vmatprep.subr.mxu0 0.0
      %849 = vmatpush1.msra.mxu0 0.0
      %850 = vmatprep.subr.mxu0 0.0
      %851 = vmatpush1.msra.mxu0 0.0
      %852 = vmatprep.subr.mxu0 0.0
      %853 = vmatpush1.msra.mxu0 0.0
      %854 = vmatprep.subr.mxu0 0.0
      %855 = vmatpush1.msra.mxu0 0.0
      %856 = vmatprep.subr.mxu0 0.0
      %857 = vmatpush1.msra.mxu0 0.0
      %858 = vmatprep.subr.mxu0 0.0
      %859 = vmatpush1.msra.mxu0 0.0
      %860 = vmatprep.subr.mxu0 0.0
      %861 = vmatpush1.msra.mxu0 %v817
      %862 = vmatprep.subr.mxu0 0.0
      %863 = vmatpush2.msra.mxu0 0.0
      %864 = vmatprep.subr.mxu0 0.0
      %865 = vmatpush2.msra.mxu0 0.0
      %866 = vmatprep.subr.mxu0 0.0
      %867 = vmatpush2.msra.mxu0 0.0
      %868 = vmatprep.subr.mxu0 0.0
      %869 = vmatpush2.msra.mxu0 0.0
      %870 = vmatprep.subr.mxu0 0.0
      %871 = vmatpush2.msra.mxu0 0.0
      %872 = vmatprep.subr.mxu0 0.0
      %873 = vmatpush2.msra.mxu0 0.0
      %874 = vmatprep.subr.mxu0 0.0
      %875 = vmatpush2.msra.mxu0 0.0
      %876 = vmatprep.subr.mxu0 0.0
      %877 = vmatpush2.msra.mxu0 0.0
      %878 = vmatprep.subr.mxu0 0.0
      %879 = vmatpush2.msra.mxu0 0.0
      %880 = vmatprep.subr.mxu0 0.0
      %881 = vmatpush2.msra.mxu0 0.0
      %882 = vmatprep.subr.mxu0 0.0
      %883 = vmatpush2.msra.mxu0 0.0
      %884 = vmatprep.subr.mxu0 0.0
      %885 = vmatpush2.msra.mxu0 0.0
      %886 = vmatprep.subr.mxu0 0.0
      %887 = vmatpush2.msra.mxu0 0.0
      %888 = vmatprep.subr.mxu0 0.0
      %889 = vmatpush2.msra.mxu0 0.0
      %890 = vmatprep.subr.mxu0 0.0
      %891 = vmatpush2.msra.mxu0 0.0
      %892 = vmatprep.subr.mxu0 0.0
      %893 = vmatpush2.msra.mxu0 0.0
      %894 = vmatprep.mubr.f32.mxu0 0.0
      %895 = vmatmul.mubr.f32.gmra.mxu0 %v819
      %v896 = vpop.f32.mrf.mxu0
      %v897 = vadd.f32 0.0, %v896
      %v898 = vpop.f32.mrf.mxu0
      %899 = vmatprep.mubr.f32.mxu0 0.0
      %900 = vmatmul.mubr.f32.gmra.mxu0 %v822
      %v901 = vpop.f32.mrf.mxu0
      %v902 = vadd.f32 0.0, %v901
      %v903 = vpop.f32.mrf.mxu0
      %904 = vmatprep.mubr.f32.mxu0 0.0
      %905 = vmatmul.mubr.f32.gmra.mxu0 %v825
      %v906 = vpop.f32.mrf.mxu0
      %v907 = vadd.f32 0.0, %v906
      %v908 = vpop.f32.mrf.mxu0
      %909 = vmatprep.mubr.f32.mxu0 0.0
      %910 = vmatmul.mubr.f32.gmra.mxu0 %v828
      %v911 = vpop.f32.mrf.mxu0
      %v912 = vadd.f32 0.0, %v911
      %v913 = vpop.f32.mrf.mxu0
      %914 = vdwg.mxu0
      %v915 = vadd.f32 %v794, %v897
      %v916 = vadd.f32 %v799, %v902
      %v917 = vadd.f32 %v804, %v907
      %v918 = vadd.f32 %v809, %v912
      %v920 = vlaneseq
      %v921 = vshrl.u32 %v920, 7
      %v922 = vsub.s32 0, %v921
      %v923 = vrot.slane %v370, %v922
      %v925 = vadd.f32 %v915, %v923
      %v926 = vadd.f32 %v916, %v923
      %v927 = vadd.f32 %v917, %v923
      %v928 = vadd.f32 %v918, %v923
      %v929 = vmax.f32 %v925, 0.0
      %v930 = vmax.f32 %v926, 0.0
      %v931 = vmax.f32 %v927, 0.0
      %v932 = vmax.f32 %v928, 0.0
      %v933 = vadd.f32 %v929, %v589
      %v934 = vadd.f32 %v930, %v590
      %v935 = vadd.f32 %v931, %v591
      %v936 = vadd.f32 %v932, %v592
      %v937 = vsel %vm597, %v933, 0.0
      %v938 = vsel %vm598, %v934, 0.0
      %v939 = vsel %vm599, %v935, 0.0
      %v940 = vsel %vm600, %v936, 0.0
      %941 = vst.msk [vmem:[#allocation2 + $0x1] sm:$0xff] %vm605, %v937
      %942 = vst.msk [vmem:[#allocation2 + $0x9] sm:$0xff] %vm605, %v938
      %943 = vst.msk [vmem:[#allocation2 + $0x11] sm:$0xff] %vm605, %v939
      %944 = vst.msk [vmem:[#allocation2 + $0x19] sm:$0x7f] %vm609, %v940
      %v945 = vld [vmem:[#allocation2] sm:$0xff]
      %v946 = vld [vmem:[#allocation2 + $0x8] sm:$0xff]
      %v947 = vld [vmem:[#allocation2 + $0x10] sm:$0xff]
      %v948 = vld [vmem:[#allocation2 + $0x18] sm:$0x7f]
      %v949 = vld [vmem:[%s6] sm:$0xff]
      %s950 = scalar_lea.vmem %s6, 8
      %v951 = vld [vmem:[%s950] sm:$0xff]
      %v953 = vsel %vm605, %v937, 0
      %v956 = vsel %vm605, %v938, 0
      %v959 = vsel %vm605, %v939, 0
      %v962 = vsel %vm605, %v940, 0
      %964 = vmatprep.subr.mxu0 0.0
      %965 = vmatpush1.msra.mxu0 0.0
      %966 = vmatprep.subr.mxu0 0.0
      %967 = vmatpush1.msra.mxu0 0.0
      %968 = vmatprep.subr.mxu0 0.0
      %969 = vmatpush1.msra.mxu0 0.0
      %970 = vmatprep.subr.mxu0 0.0
      %971 = vmatpush1.msra.mxu0 0.0
      %972 = vmatprep.subr.mxu0 0.0
      %973 = vmatpush1.msra.mxu0 0.0
      %974 = vmatprep.subr.mxu0 0.0
      %975 = vmatpush1.msra.mxu0 0.0
      %976 = vmatprep.subr.mxu0 0.0
      %977 = vmatpush1.msra.mxu0 0.0
      %978 = vmatprep.subr.mxu0 0.0
      %979 = vmatpush1.msra.mxu0 0.0
      %980 = vmatprep.subr.mxu0 0.0
      %981 = vmatpush1.msra.mxu0 0.0
      %982 = vmatprep.subr.mxu0 0.0
      %983 = vmatpush1.msra.mxu0 0.0
      %984 = vmatprep.subr.mxu0 0.0
      %985 = vmatpush1.msra.mxu0 0.0
      %986 = vmatprep.subr.mxu0 0.0
      %987 = vmatpush1.msra.mxu0 0.0
      %988 = vmatprep.subr.mxu0 0.0
      %989 = vmatpush1.msra.mxu0 0.0
      %990 = vmatprep.subr.mxu0 0.0
      %991 = vmatpush1.msra.mxu0 0.0
      %992 = vmatprep.subr.mxu0 0.0
      %993 = vmatpush1.msra.mxu0 0.0
      %994 = vmatprep.subr.mxu0 0.0
      %995 = vmatpush1.msra.mxu0 %v951
      %996 = vmatprep.subr.mxu0 0.0
      %997 = vmatpush2.msra.mxu0 0.0
      %998 = vmatprep.subr.mxu0 0.0
      %999 = vmatpush2.msra.mxu0 0.0
      %1000 = vmatprep.subr.mxu0 0.0
      %1001 = vmatpush2.msra.mxu0 0.0
      %1002 = vmatprep.subr.mxu0 0.0
      %1003 = vmatpush2.msra.mxu0 0.0
      %1004 = vmatprep.subr.mxu0 0.0
      %1005 = vmatpush2.msra.mxu0 0.0
      %1006 = vmatprep.subr.mxu0 0.0
      %1007 = vmatpush2.msra.mxu0 0.0
      %1008 = vmatprep.subr.mxu0 0.0
      %1009 = vmatpush2.msra.mxu0 0.0
      %1010 = vmatprep.subr.mxu0 0.0
      %1011 = vmatpush2.msra.mxu0 0.0
      %1012 = vmatprep.subr.mxu0 0.0
      %1013 = vmatpush2.msra.mxu0 0.0
      %1014 = vmatprep.subr.mxu0 0.0
      %1015 = vmatpush2.msra.mxu0 0.0
      %1016 = vmatprep.subr.mxu0 0.0
      %1017 = vmatpush2.msra.mxu0 0.0
      %1018 = vmatprep.subr.mxu0 0.0
      %1019 = vmatpush2.msra.mxu0 0.0
      %1020 = vmatprep.subr.mxu0 0.0
      %1021 = vmatpush2.msra.mxu0 0.0
      %1022 = vmatprep.subr.mxu0 0.0
      %1023 = vmatpush2.msra.mxu0 0.0
      %1024 = vmatprep.subr.mxu0 0.0
      %1025 = vmatpush2.msra.mxu0 0.0
      %1026 = vmatprep.subr.mxu0 0.0
      %1027 = vmatpush2.msra.mxu0 0.0
      %1028 = vmatprep.mubr.f32.mxu0 0.0
      %1029 = vmatmul.mubr.f32.gmra.mxu0 %v953
      %v1030 = vpop.f32.mrf.mxu0
      %v1031 = vadd.f32 0.0, %v1030
      %v1032 = vpop.f32.mrf.mxu0
      %1033 = vmatprep.mubr.f32.mxu0 0.0
      %1034 = vmatmul.mubr.f32.gmra.mxu0 %v956
      %v1035 = vpop.f32.mrf.mxu0
      %v1036 = vadd.f32 0.0, %v1035
      %v1037 = vpop.f32.mrf.mxu0
      %1038 = vmatprep.mubr.f32.mxu0 0.0
      %1039 = vmatmul.mubr.f32.gmra.mxu0 %v959
      %v1040 = vpop.f32.mrf.mxu0
      %v1041 = vadd.f32 0.0, %v1040
      %v1042 = vpop.f32.mrf.mxu0
      %1043 = vmatprep.mubr.f32.mxu0 0.0
      %1044 = vmatmul.mubr.f32.gmra.mxu0 %v962
      %v1045 = vpop.f32.mrf.mxu0
      %v1046 = vadd.f32 0.0, %v1045
      %v1047 = vpop.f32.mrf.mxu0
      %1048 = vdwg.mxu0
      %v1050 = vsel %vm605, %v945, 0
      %v1053 = vsel %vm605, %v946, 0
      %v1056 = vsel %vm605, %v947, 0
      %v1059 = vsel %vm605, %v948, 0
      %1061 = vmatprep.subr.mxu0 0.0
      %1062 = vmatpush1.msra.mxu0 0.0
      %1063 = vmatprep.subr.mxu0 0.0
      %1064 = vmatpush1.msra.mxu0 0.0
      %1065 = vmatprep.subr.mxu0 0.0
      %1066 = vmatpush1.msra.mxu0 0.0
      %1067 = vmatprep.subr.mxu0 0.0
      %1068 = vmatpush1.msra.mxu0 0.0
      %1069 = vmatprep.subr.mxu0 0.0
      %1070 = vmatpush1.msra.mxu0 0.0
      %1071 = vmatprep.subr.mxu0 0.0
      %1072 = vmatpush1.msra.mxu0 0.0
      %1073 = vmatprep.subr.mxu0 0.0
      %1074 = vmatpush1.msra.mxu0 0.0
      %1075 = vmatprep.subr.mxu0 0.0
      %1076 = vmatpush1.msra.mxu0 0.0
      %1077 = vmatprep.subr.mxu0 0.0
      %1078 = vmatpush1.msra.mxu0 0.0
      %1079 = vmatprep.subr.mxu0 0.0
      %1080 = vmatpush1.msra.mxu0 0.0
      %1081 = vmatprep.subr.mxu0 0.0
      %1082 = vmatpush1.msra.mxu0 0.0
      %1083 = vmatprep.subr.mxu0 0.0
      %1084 = vmatpush1.msra.mxu0 0.0
      %1085 = vmatprep.subr.mxu0 0.0
      %1086 = vmatpush1.msra.mxu0 0.0
      %1087 = vmatprep.subr.mxu0 0.0
      %1088 = vmatpush1.msra.mxu0 0.0
      %1089 = vmatprep.subr.mxu0 0.0
      %1090 = vmatpush1.msra.mxu0 0.0
      %1091 = vmatprep.subr.mxu0 0.0
      %1092 = vmatpush1.msra.mxu0 %v949
      %1093 = vmatprep.subr.mxu0 0.0
      %1094 = vmatpush2.msra.mxu0 0.0
      %1095 = vmatprep.subr.mxu0 0.0
      %1096 = vmatpush2.msra.mxu0 0.0
      %1097 = vmatprep.subr.mxu0 0.0
      %1098 = vmatpush2.msra.mxu0 0.0
      %1099 = vmatprep.subr.mxu0 0.0
      %1100 = vmatpush2.msra.mxu0 0.0
      %1101 = vmatprep.subr.mxu0 0.0
      %1102 = vmatpush2.msra.mxu0 0.0
      %1103 = vmatprep.subr.mxu0 0.0
      %1104 = vmatpush2.msra.mxu0 0.0
      %1105 = vmatprep.subr.mxu0 0.0
      %1106 = vmatpush2.msra.mxu0 0.0
      %1107 = vmatprep.subr.mxu0 0.0
      %1108 = vmatpush2.msra.mxu0 0.0
      %1109 = vmatprep.subr.mxu0 0.0
      %1110 = vmatpush2.msra.mxu0 0.0
      %1111 = vmatprep.subr.mxu0 0.0
      %1112 = vmatpush2.msra.mxu0 0.0
      %1113 = vmatprep.subr.mxu0 0.0
      %1114 = vmatpush2.msra.mxu0 0.0
      %1115 = vmatprep.subr.mxu0 0.0
      %1116 = vmatpush2.msra.mxu0 0.0
      %1117 = vmatprep.subr.mxu0 0.0
      %1118 = vmatpush2.msra.mxu0 0.0
      %1119 = vmatprep.subr.mxu0 0.0
      %1120 = vmatpush2.msra.mxu0 0.0
      %1121 = vmatprep.subr.mxu0 0.0
      %1122 = vmatpush2.msra.mxu0 0.0
      %1123 = vmatprep.subr.mxu0 0.0
      %1124 = vmatpush2.msra.mxu0 0.0
      %1125 = vmatprep.mubr.f32.mxu0 0.0
      %1126 = vmatmul.mubr.f32.gmra.mxu0 %v1050
      %v1127 = vpop.f32.mrf.mxu0
      %v1128 = vadd.f32 %v1031, %v1127
      %v1129 = vpop.f32.mrf.mxu0
      %1130 = vmatprep.mubr.f32.mxu0 0.0
      %1131 = vmatmul.mubr.f32.gmra.mxu0 %v1053
      %v1132 = vpop.f32.mrf.mxu0
      %v1133 = vadd.f32 %v1036, %v1132
      %v1134 = vpop.f32.mrf.mxu0
      %1135 = vmatprep.mubr.f32.mxu0 0.0
      %1136 = vmatmul.mubr.f32.gmra.mxu0 %v1056
      %v1137 = vpop.f32.mrf.mxu0
      %v1138 = vadd.f32 %v1041, %v1137
      %v1139 = vpop.f32.mrf.mxu0
      %1140 = vmatprep.mubr.f32.mxu0 0.0
      %1141 = vmatmul.mubr.f32.gmra.mxu0 %v1059
      %v1142 = vpop.f32.mrf.mxu0
      %v1143 = vadd.f32 %v1046, %v1142
      %v1144 = vpop.f32.mrf.mxu0
      %1145 = vdwg.mxu0
      %v1146 = vld [vmem:[#allocation2 + $0x2] sm:$0xff]
      %v1147 = vld [vmem:[#allocation2 + $0xa] sm:$0xff]
      %v1148 = vld [vmem:[#allocation2 + $0x12] sm:$0xff]
      %v1149 = vld [vmem:[#allocation2 + $0x1a] sm:$0x7f]
      %s1150 = scalar_lea.vmem %s6, 16
      %v1151 = vld [vmem:[%s1150] sm:$0xff]
      %v1153 = vsel %vm605, %v1146, 0
      %v1156 = vsel %vm605, %v1147, 0
      %v1159 = vsel %vm605, %v1148, 0
      %v1162 = vsel %vm605, %v1149, 0
      %1164 = vmatprep.subr.mxu0 0.0
      %1165 = vmatpush1.msra.mxu0 0.0
      %1166 = vmatprep.subr.mxu0 0.0
      %1167 = vmatpush1.msra.mxu0 0.0
      %1168 = vmatprep.subr.mxu0 0.0
      %1169 = vmatpush1.msra.mxu0 0.0
      %1170 = vmatprep.subr.mxu0 0.0
      %1171 = vmatpush1.msra.mxu0 0.0
      %1172 = vmatprep.subr.mxu0 0.0
      %1173 = vmatpush1.msra.mxu0 0.0
      %1174 = vmatprep.subr.mxu0 0.0
      %1175 = vmatpush1.msra.mxu0 0.0
      %1176 = vmatprep.subr.mxu0 0.0
      %1177 = vmatpush1.msra.mxu0 0.0
      %1178 = vmatprep.subr.mxu0 0.0
      %1179 = vmatpush1.msra.mxu0 0.0
      %1180 = vmatprep.subr.mxu0 0.0
      %1181 = vmatpush1.msra.mxu0 0.0
      %1182 = vmatprep.subr.mxu0 0.0
      %1183 = vmatpush1.msra.mxu0 0.0
      %1184 = vmatprep.subr.mxu0 0.0
      %1185 = vmatpush1.msra.mxu0 0.0
      %1186 = vmatprep.subr.mxu0 0.0
      %1187 = vmatpush1.msra.mxu0 0.0
      %1188 = vmatprep.subr.mxu0 0.0
      %1189 = vmatpush1.msra.mxu0 0.0
      %1190 = vmatprep.subr.mxu0 0.0
      %1191 = vmatpush1.msra.mxu0 0.0
      %1192 = vmatprep.subr.mxu0 0.0
      %1193 = vmatpush1.msra.mxu0 0.0
      %1194 = vmatprep.subr.mxu0 0.0
      %1195 = vmatpush1.msra.mxu0 %v1151
      %1196 = vmatprep.subr.mxu0 0.0
      %1197 = vmatpush2.msra.mxu0 0.0
      %1198 = vmatprep.subr.mxu0 0.0
      %1199 = vmatpush2.msra.mxu0 0.0
      %1200 = vmatprep.subr.mxu0 0.0
      %1201 = vmatpush2.msra.mxu0 0.0
      %1202 = vmatprep.subr.mxu0 0.0
      %1203 = vmatpush2.msra.mxu0 0.0
      %1204 = vmatprep.subr.mxu0 0.0
      %1205 = vmatpush2.msra.mxu0 0.0
      %1206 = vmatprep.subr.mxu0 0.0
      %1207 = vmatpush2.msra.mxu0 0.0
      %1208 = vmatprep.subr.mxu0 0.0
      %1209 = vmatpush2.msra.mxu0 0.0
      %1210 = vmatprep.subr.mxu0 0.0
      %1211 = vmatpush2.msra.mxu0 0.0
      %1212 = vmatprep.subr.mxu0 0.0
      %1213 = vmatpush2.msra.mxu0 0.0
      %1214 = vmatprep.subr.mxu0 0.0
      %1215 = vmatpush2.msra.mxu0 0.0
      %1216 = vmatprep.subr.mxu0 0.0
      %1217 = vmatpush2.msra.mxu0 0.0
      %1218 = vmatprep.subr.mxu0 0.0
      %1219 = vmatpush2.msra.mxu0 0.0
      %1220 = vmatprep.subr.mxu0 0.0
      %1221 = vmatpush2.msra.mxu0 0.0
      %1222 = vmatprep.subr.mxu0 0.0
      %1223 = vmatpush2.msra.mxu0 0.0
      %1224 = vmatprep.subr.mxu0 0.0
      %1225 = vmatpush2.msra.mxu0 0.0
      %1226 = vmatprep.subr.mxu0 0.0
      %1227 = vmatpush2.msra.mxu0 0.0
      %1228 = vmatprep.mubr.f32.mxu0 0.0
      %1229 = vmatmul.mubr.f32.gmra.mxu0 %v1153
      %v1230 = vpop.f32.mrf.mxu0
      %v1231 = vadd.f32 0.0, %v1230
      %v1232 = vpop.f32.mrf.mxu0
      %1233 = vmatprep.mubr.f32.mxu0 0.0
      %1234 = vmatmul.mubr.f32.gmra.mxu0 %v1156
      %v1235 = vpop.f32.mrf.mxu0
      %v1236 = vadd.f32 0.0, %v1235
      %v1237 = vpop.f32.mrf.mxu0
      %1238 = vmatprep.mubr.f32.mxu0 0.0
      %1239 = vmatmul.mubr.f32.gmra.mxu0 %v1159
      %v1240 = vpop.f32.mrf.mxu0
      %v1241 = vadd.f32 0.0, %v1240
      %v1242 = vpop.f32.mrf.mxu0
      %1243 = vmatprep.mubr.f32.mxu0 0.0
      %1244 = vmatmul.mubr.f32.gmra.mxu0 %v1162
      %v1245 = vpop.f32.mrf.mxu0
      %v1246 = vadd.f32 0.0, %v1245
      %v1247 = vpop.f32.mrf.mxu0
      %1248 = vdwg.mxu0
      %v1249 = vadd.f32 %v1128, %v1231
      %v1250 = vadd.f32 %v1133, %v1236
      %v1251 = vadd.f32 %v1138, %v1241
      %v1252 = vadd.f32 %v1143, %v1246
      %v1254 = vlaneseq
      %v1255 = vshrl.u32 %v1254, 7
      %v1256 = vsub.s32 0, %v1255
      %v1257 = vrot.slane %v371, %v1256
      %v1259 = vadd.f32 %v1249, %v1257
      %v1260 = vadd.f32 %v1250, %v1257
      %v1261 = vadd.f32 %v1251, %v1257
      %v1262 = vadd.f32 %v1252, %v1257
      %v1263 = vmax.f32 %v1259, 0.0
      %v1264 = vmax.f32 %v1260, 0.0
      %v1265 = vmax.f32 %v1261, 0.0
      %v1266 = vmax.f32 %v1262, 0.0
      %v1267 = vadd.f32 %v1263, %v933
      %v1268 = vadd.f32 %v1264, %v934
      %v1269 = vadd.f32 %v1265, %v935
      %v1270 = vadd.f32 %v1266, %v936
      %1271 = vst.msk [vmem:[%s307] sm:$0xff] %vm605, %v1267
      %1272 = vst.msk [vmem:[%s307 + $0x8] sm:$0xff] %vm605, %v1268
      %1273 = vst.msk [vmem:[%s307 + $0x10] sm:$0xff] %vm605, %v1269
      %1274 = vst.msk [vmem:[%s307 + $0x18] sm:$0x7f] %vm609, %v1270
      %1275 = vst.msk [vmem:[%s307 + $0x1f] sm:$0x1] %vm309, 0.0
      %s1276 = smul.u32 4, %s19
      %p1277 = scmp.lt.s32.totalorder %s1276, 7
      %s1278 = scalar_select %p1277, %s1276, 7
      %s1279 = smul.addr %s1278, 8
      %s1280 = scalar_lea.vmem %s8, %s1279
      // Predicated region
      $region53: #{_lambda_.1} parent=51 // pred_check
        %p1281 = pneg %p210
      $region54: #{_lambda_.1} parent=51 // pred_check_branch
        %1283 = sbr.rel (%p1281) target = $region56
      $region55: #{_lambda_.1} parent=51 // pred_region
        %s1284 = smul.u32 4, %s19
      $region56: #{_lambda_.1} parent=51 // pred_fallthru
        _
    $region52: #{_lambda_.1} parent=5 // pred_fallthru
      _
    %p1285 = scmp.le.s32.totalorder 2, %s14
    // Predicated region
    $region57: #{_lambda_.1} parent=5 // pred_check
      %p1286 = pneg %p1285
    $region58: #{_lambda_.1} parent=5 // pred_check_branch
      %1288 = sbr.rel (%p1286) target = $region60
    $region59: #{_lambda_.1} parent=5 // pred_region
      %s1289 = ssub.s32 %s14, 2
      // Predicated region
      $region61: #{_lambda_.1} parent=59 // pred_check
        %p1290 = pneg %p216
      $region62: #{_lambda_.1} parent=59 // pred_check_branch
        %1292 = sbr.rel (%p1290) target = $region64
      $region63: #{_lambda_.1} parent=59 // pred_region
        %s1293 = smul.u32 4, %s20
        %p1294 = scmp.lt.s32.totalorder %s1293, 7
        %s1295 = scalar_select %p1294, %s1293, 7
        %s1296 = smul.addr %s1295, 8
        %s1297 = scalar_lea.vmem %s8, %s1296
      $region64: #{_lambda_.1} parent=59 // pred_fallthru
        _
    $region60: #{_lambda_.1} parent=5 // pred_fallthru
      _
  $region6: #{_lambda_.1} parent=0 // loop_footer
    %s18 = sadd.s32 1, %s14
  $region7: #{_lambda_.1} parent=0 // loop_footer_branch
    %13 = sbr.rel target = $region3
  $region8: #{_lambda_.1} parent=0 // loop_exit
    _

</llo_original>
